<compile_context>
chip_gen: v7x
topology: tpu7x:2x2x1
jax: 0.10.0
libtpu: 0.0.40
codegen_flags: <defaults>
</compile_context>

<pallas_src>
import functools

import jax
import jax.numpy as jnp
from jax.experimental import pallas as pl
from jax.experimental.pallas import tpu as pltpu


def _pick_tile(total, target):
    """Largest divisor of `total` that is <= target (degenerates to `total`)."""
    if total <= target:
        return total
    best = 1
    for cand in range(1, target + 1):
        if total % cand == 0:
            best = cand
    return best


# ----------------------------------------------------------------------------
# Kernel 1: stacked (src, trg) encoder dense (tanh) + fused time-mean pooling
# ----------------------------------------------------------------------------

def _encode_pool_kernel(emb_ref, w_ref, b_ref, h_ref, pool_ref, *, inv_t):
    """emb:(TT,E) bf16, w:(E,H) bf16, b:(1,H) f32 ->
       h:(TT,H) bf16, pool:(1,H) f32 (mean over T, accumulated over t axis)."""
    @pl.when(pl.program_id(2) == 0)
    def _():
        pool_ref[...] = jnp.zeros_like(pool_ref)

    h = jnp.tanh(jnp.dot(emb_ref[...], w_ref[...],
                         preferred_element_type=jnp.float32)
                 + b_ref[...])                                       # (TT,H) f32
    h_ref[...] = h.astype(h_ref.dtype)
    pool_ref[...] += jnp.sum(h, axis=0, keepdims=True) * inv_t


def _encode_pool_call(emb_bf16, w_bf16, b_f32):
    """emb:(S,B,T,E), w:(S,E,H), b:(S,1,H) -> h:(S,B,T,H), pool:(S,B,1,H)."""
    S, B, T, E = emb_bf16.shape
    H = w_bf16.shape[-1]
    TT = _pick_tile(T, 256)
    nT = T // TT
    kernel = functools.partial(_encode_pool_kernel, inv_t=1.0 / T)
    h, pool = pl.pallas_call(
        kernel,
        out_shape=(jax.ShapeDtypeStruct((S, B, T, H), jnp.bfloat16),
                   jax.ShapeDtypeStruct((S, B, 1, H), jnp.float32)),
        grid=(S, B, nT),
        in_specs=[
            pl.BlockSpec((None, None, TT, E), lambda s, b, t: (s, b, t, 0)),
            pl.BlockSpec((None, E, H), lambda s, b, t: (s, 0, 0)),
            pl.BlockSpec((None, 1, H), lambda s, b, t: (s, 0, 0)),
        ],
        out_specs=(
            pl.BlockSpec((None, None, TT, H), lambda s, b, t: (s, b, t, 0)),
            # resident accumulator across the (innermost) time axis
            pl.BlockSpec((None, None, 1, H), lambda s, b, t: (s, b, 0, 0)),
        ),
        compiler_params=pltpu.CompilerParams(
            dimension_semantics=("parallel", "parallel", "arbitrary")),
    )(emb_bf16, w_bf16, b_f32)
    return h, pool


def encode_pool_both(src_emb, trg_emb, w_src, w_trg, b_src, b_trg):
    """Run both encoders. If src/trg lengths match, fuse them into a single
    pallas_call (stacked leading axis); otherwise fall back to two calls."""
    if src_emb.shape == trg_emb.shape:
        h, pool = _encode_pool_call(jnp.stack([src_emb, trg_emb]),
                                    jnp.stack([w_src, w_trg]),
                                    jnp.stack([b_src, b_trg]))
        return h[0], pool[0, :, 0, :], h[1], pool[1, :, 0, :]
    hs, ps = _encode_pool_call(src_emb[None], w_src[None], b_src[None])
    ht, pt = _encode_pool_call(trg_emb[None], w_trg[None], b_trg[None])
    return hs[0], ps[0, :, 0, :], ht[0], pt[0, :, 0, :]


# ----------------------------------------------------------------------------
# Kernel 2: attention over src + fused mean pooling of the context
# ----------------------------------------------------------------------------

def _attn_pool_kernel(q_ref, k_ref, v_ref, o_ref, *, scale, inv_t):
    """q,k,v:(1,T,H) bf16 -> o:(1,1,H) f32 (time-mean of attention context)."""
    q = q_ref[0]
    k = k_ref[0]
    v = v_ref[0]
    s = jnp.dot(q, k.T, preferred_element_type=jnp.float32) * scale   # (T, T)
    m = jnp.max(s, axis=-1, keepdims=True)
    p = jnp.exp(s - m)
    p = p * pl.reciprocal(jnp.sum(p, axis=-1, keepdims=True), approx=True)
    # TODO(synk): for large T, tile the key axis with an online (flash-style)
    # softmax instead of materializing the full (T,T) score block.
    ctx = jnp.dot(p.astype(jnp.bfloat16), v,
                  preferred_element_type=jnp.float32)                 # (T, H)
    o_ref[0] = jnp.sum(ctx, axis=0, keepdims=True) * inv_t            # (1, H)


def attention_pool(q, k, v):
    B, T, H = q.shape
    kernel = functools.partial(_attn_pool_kernel,
                               scale=1.0 / (H ** 0.5), inv_t=1.0 / T)
    return pl.pallas_call(
        kernel,
        out_shape=jax.ShapeDtypeStruct((B, 1, H), jnp.float32),
        grid=(B,),
        in_specs=[pl.BlockSpec((1, T, H), lambda b: (b, 0, 0)),
                  pl.BlockSpec((1, T, H), lambda b: (b, 0, 0)),
                  pl.BlockSpec((1, T, H), lambda b: (b, 0, 0))],
        out_specs=pl.BlockSpec((1, 1, H), lambda b: (b, 0, 0)),
        compiler_params=pltpu.CompilerParams(
            dimension_semantics=("parallel",)),
    )(q, k, v)


# ----------------------------------------------------------------------------
# Kernel 3: fused prior/posterior projections + Gaussian KL(q||p) + rsample
# ----------------------------------------------------------------------------

def _latent_kernel(srcp_ref, ctxp_ref, trgp_ref, eps_ref,
                   wp_ref, bp_ref, wqc_ref, wqt_ref, bq_ref,
                   klz_ref, *, latent):
    """Lane-dense (H,2L) projections produce mu||log_var in one matmul each.
    KL matches torch.distributions.kl_divergence(Normal(mu_q, exp(.5 lv_q)),
    Normal(mu_p, exp(.5 lv_p))); z = mu_q + exp(.5 lv_q) * eps.
    Output is one lane-dense (B, 2L) block laid out as [kl || z]."""
    prior = (jnp.dot(srcp_ref[...], wp_ref[...],
                     preferred_element_type=jnp.float32) + bp_ref[...])
    post = (jnp.dot(ctxp_ref[...], wqc_ref[...],
                    preferred_element_type=jnp.float32)
            + jnp.dot(trgp_ref[...], wqt_ref[...],
                      preferred_element_type=jnp.float32)
            + bq_ref[...])
    mu_p, lv_p = prior[:, :latent], prior[:, latent:]
    mu_q, lv_q = post[:, :latent], post[:, latent:]
    var_q = jnp.exp(lv_q)
    inv_var_p = jnp.exp(-lv_p)
    kl = (0.5 * (lv_p - lv_q)
          + 0.5 * (var_q + (mu_q - mu_p) ** 2) * inv_var_p
          - 0.5)
    z = mu_q + jnp.exp(0.5 * lv_q) * eps_ref[...]
    klz_ref[...] = jnp.concatenate([kl, z], axis=-1)      # single full-lane vst


def latent_kl_rsample(src_pool, ctx_pool, trg_pool, eps,
                      wp, bp, wqc, wqt, bq, latent):
    B, H = src_pool.shape
    L = latent
    full2 = lambda shape: pl.BlockSpec(shape, lambda i: (0, 0))
    kernel = functools.partial(_latent_kernel, latent=L)
    klz = pl.pallas_call(
        kernel,
        out_shape=jax.ShapeDtypeStruct((B, 2 * L), jnp.float32),
        grid=(1,),
        in_specs=[full2((B, H)), full2((B, H)), full2((B, H)), full2((B, L)),
                  full2((H, 2 * L)), full2((1, 2 * L)),
                  full2((H, 2 * L)), full2((H, 2 * L)), full2((1, 2 * L))],
        out_specs=full2((B, 2 * L)),
    )(src_pool, ctx_pool, trg_pool, eps, wp, bp, wqc, wqt, bq)
    return klz[:, :L], klz[:, L:]


# ----------------------------------------------------------------------------
# Kernel 4: decoder hidden (no [emb ; z] concat) + vocab log-softmax
# ----------------------------------------------------------------------------

def _decoder_kernel(emb_ref, z_ref, we_ref, wz_ref, bh_ref, wo_ref, bo_ref,
                    ll_ref, hid_ref):
    """emb:(1,TT,E) bf16, z:(1,1,L) f32 ->
       ll:(1,TT,Vt) f32 log-softmax, hid:(1,1,H) f32 (last timestep)."""
    emb = emb_ref[0]                                                  # (TT, E)
    zw = jnp.dot(z_ref[0].astype(jnp.bfloat16), wz_ref[...],
                 preferred_element_type=jnp.float32)                  # (1, H)
    h = jnp.tanh(jnp.dot(emb, we_ref[...],
                         preferred_element_type=jnp.float32)
                 + zw + bh_ref[...])                                  # (TT, H)
    logits = (jnp.dot(h.astype(jnp.bfloat16), wo_ref[...],
                      preferred_element_type=jnp.float32) + bo_ref[...])
    m = jnp.max(logits, axis=-1, keepdims=True)
    s = logits - m
    ll_ref[0] = s - jnp.log(jnp.sum(jnp.exp(s), axis=-1, keepdims=True))

    @pl.when(pl.program_id(1) == pl.num_programs(1) - 1)
    def _():
        hid_ref[0] = h[-1:, :]


def decode(trg_emb_bf16, z, we, wz, bh, wo, bo):
    B, T, E = trg_emb_bf16.shape
    H = we.shape[1]
    L = wz.shape[0]
    Vt = wo.shape[1]
    # Cap the per-step (TT, Vt) footprint; full-Vt rows are kept so the
    # log-softmax normalizes over the whole vocabulary.
    # TODO(synk): for very large vocabularies, tile Vt with a two-pass
    # logsumexp and set pltpu.CompilerParams(vmem_limit_bytes=...) (v7x 64MiB).
    TT = _pick_tile(T, 128)
    nT = T // TT
    z3 = z.reshape(B, 1, L)
    ll, hid = pl.pallas_call(
        _decoder_kernel,
        out_shape=(jax.ShapeDtypeStruct((B, T, Vt), jnp.float32),
                   jax.ShapeDtypeStruct((B, 1, H), jnp.float32)),
        grid=(B, nT),
        in_specs=[
            pl.BlockSpec((1, TT, E), lambda b, t: (b, t, 0)),
            pl.BlockSpec((1, 1, L), lambda b, t: (b, 0, 0)),
            pl.BlockSpec((E, H), lambda b, t: (0, 0)),
            pl.BlockSpec((L, H), lambda b, t: (0, 0)),
            pl.BlockSpec((1, H), lambda b, t: (0, 0)),
            pl.BlockSpec((H, Vt), lambda b, t: (0, 0)),
            pl.BlockSpec((1, Vt), lambda b, t: (0, 0)),
        ],
        out_specs=(pl.BlockSpec((1, TT, Vt), lambda b, t: (b, t, 0)),
                   pl.BlockSpec((1, 1, H), lambda b, t: (b, 0, 0))),
        compiler_params=pltpu.CompilerParams(
            dimension_semantics=("parallel", "arbitrary")),
    )(trg_emb_bf16, z3, we, wz, bh, wo, bo)
    return ll, hid.reshape(B, H)


# ----------------------------------------------------------------------------
# Parameters + forward
# ----------------------------------------------------------------------------

def init_params(src_vocab, trg_vocab, embed, hidden, latent, key):
    """Deterministic synthetic parameters (no checkpoint loading)."""
    ks = jax.random.split(key, 10)

    def nrm(k, shape, scale=0.1):
        return (scale * jax.random.normal(k, shape)).astype(jnp.float32)

    return dict(
        src_embed=nrm(ks[0], (src_vocab, embed)),
        trg_embed=nrm(ks[1], (trg_vocab, embed)),
        w_src_enc=nrm(ks[2], (embed, hidden)),
        b_src_enc=jnp.zeros((1, hidden), jnp.float32),
        w_trg_enc=nrm(ks[3], (embed, hidden)),
        b_trg_enc=jnp.zeros((1, hidden), jnp.float32),
        # prior p(z|src): fused mu||log_var projection
        w_p=nrm(ks[4], (hidden, 2 * latent)),
        b_p=jnp.zeros((1, 2 * latent), jnp.float32),
        # posterior q(z|src,trg): fused mu||log_var, split by feature source
        # (attention context half / pooled trg half of the former (2H, L) mats)
        w_q_ctx=nrm(ks[5], (hidden, 2 * latent)),
        w_q_trg=nrm(ks[6], (hidden, 2 * latent)),
        b_q=jnp.zeros((1, 2 * latent), jnp.float32),
        # decoder: former (E+L, H) weight split into We / Wz (no concat)
        w_dec_e=nrm(ks[7], (embed, hidden)),
        w_dec_z=nrm(ks[8], (latent, hidden)),
        b_dec_h=jnp.zeros((1, hidden), jnp.float32),
        w_dec_o=nrm(ks[9], (hidden, trg_vocab)),
        b_dec_o=jnp.zeros((1, trg_vocab), jnp.float32),
    )


def cvae_forward(params, src, trg, eps):
    B, T = src.shape
    latent = params["w_dec_z"].shape[0]
    bf16 = lambda x: x.astype(jnp.bfloat16)

    # embedding lookups: glue gather, XLA-fused under jit
    src_emb = bf16(jnp.take(params["src_embed"], src, axis=0))        # (B,T,E)
    trg_emb = bf16(jnp.take(params["trg_embed"], trg, axis=0))        # (B,T,E)

    # both encoders in one fused pallas_call (+ fused time-mean pooling)
    enc_src, src_pool, enc_trg, trg_pool = encode_pool_both(
        src_emb, trg_emb,
        bf16(params["w_src_enc"]), bf16(params["w_trg_enc"]),
        params["b_src_enc"], params["b_trg_enc"])

    # posterior attention over src, fused with context pooling
    ctx_pool = attention_pool(enc_trg, enc_src, enc_src)              # (B,1,H)

    # fused prior/posterior projections + KL(q||p) + reparameterized sample
    kl, z = latent_kl_rsample(
        src_pool, ctx_pool.reshape(B, -1), trg_pool, eps,
        params["w_p"], params["b_p"],
        params["w_q_ctx"], params["w_q_trg"], params["b_q"], latent)

    # decoder: h = tanh(emb@We + z@Wz + b), log-softmax over trg vocab
    # TODO(synk): original BasicDecoder also conditions on encoded_src; its
    # internals are not given so that conditioning path is not reproduced.
    ll, hidden = decode(trg_emb, z, bf16(params["w_dec_e"]),
                        bf16(params["w_dec_z"]), params["b_dec_h"],
                        bf16(params["w_dec_o"]), params["b_dec_o"])
    return ll, kl, hidden


# ----------------------------------------------------------------------------
# main
# ----------------------------------------------------------------------------

if __name__ == "__main__":
    # small shapes consistent with a seq2seq CVAE forward; feature dims are
    # chosen lane-dense (multiples of 128 where it matters, 2L = 128).
    B, T = 2, 8
    SRC_VOCAB, TRG_VOCAB = 256, 256
    EMBED, HIDDEN, LATENT = 128, 128, 64

    root = jax.random.PRNGKey(0)
    k_param, k_src, k_trg, k_eps = jax.random.split(root, 4)

    params = init_params(SRC_VOCAB, TRG_VOCAB, EMBED, HIDDEN, LATENT, k_param)

    src = jax.random.randint(k_src, (B, T), 0, SRC_VOCAB, dtype=jnp.int32)
    trg = jax.random.randint(k_trg, (B, T), 0, TRG_VOCAB, dtype=jnp.int32)
    eps = jax.random.normal(k_eps, (B, LATENT), dtype=jnp.float32)

    fwd = jax.jit(cvae_forward)
    ll, kl, hidden = fwd(params, src, trg, eps)
    jax.block_until_ready((ll, kl, hidden))

    assert ll.shape == (B, T, TRG_VOCAB)
    assert kl.shape == (B, LATENT)
    assert hidden.shape == (B, HIDDEN)
    # log-softmax rows must sum to ~1 in prob space
    assert bool(jnp.allclose(jnp.exp(ll).sum(-1), 1.0, atol=1e-4))
    # KL of Gaussians is non-negative
    assert bool(jnp.all(kl >= -1e-5))

    print("KERNEL_OK")
</pallas_src>

<mosaic_0001>
module attributes {stable_mosaic.version = 11 : i64} {
  func.func @_attn_pool_kernel(%arg0: i32, %arg1: memref<1x8x128xbf16, #tpu.memory_space<vmem>>, %arg2: memref<1x8x128xbf16, #tpu.memory_space<vmem>>, %arg3: memref<1x8x128xbf16, #tpu.memory_space<vmem>>, %arg4: memref<1x1x128xf32, #tpu.memory_space<vmem>>) attributes {dimension_semantics = [#tpu.dimension_semantics<parallel>], iteration_bounds = array<i64: 2>, scalar_prefetch = 0 : i64, scratch_operands = 0 : i64, tpu.core_type = #tpu.core_type<tc>, window_params = [{transform_indices = @transform_0, window_bounds = array<i64: 1, 8, 128>}, {transform_indices = @transform_1, window_bounds = array<i64: 1, 8, 128>}, {transform_indices = @transform_2, window_bounds = array<i64: 1, 8, 128>}, {transform_indices = @transform_3, window_bounds = array<i64: 1, 1, 128>}]} {
    %c0 = arith.constant 0 : index
    %c0_0 = arith.constant 0 : index
    %c0_1 = arith.constant 0 : index
    %0 = vector.load %arg1[%c0, %c0_0, %c0_1] : memref<1x8x128xbf16, #tpu.memory_space<vmem>>, vector<1x8x128xbf16>
    %1 = vector.shape_cast %0 : vector<1x8x128xbf16> to vector<8x128xbf16>
    %c0_2 = arith.constant 0 : index
    %c0_3 = arith.constant 0 : index
    %c0_4 = arith.constant 0 : index
    %2 = vector.load %arg2[%c0_2, %c0_3, %c0_4] : memref<1x8x128xbf16, #tpu.memory_space<vmem>>, vector<1x8x128xbf16>
    %3 = vector.shape_cast %2 : vector<1x8x128xbf16> to vector<8x128xbf16>
    %c0_5 = arith.constant 0 : index
    %c0_6 = arith.constant 0 : index
    %c0_7 = arith.constant 0 : index
    %4 = vector.load %arg3[%c0_5, %c0_6, %c0_7] : memref<1x8x128xbf16, #tpu.memory_space<vmem>>, vector<1x8x128xbf16>
    %5 = vector.shape_cast %4 : vector<1x8x128xbf16> to vector<8x128xbf16>
    %6 = tpu.transpose %3, [1, 0] : vector<8x128xbf16> -> vector<128x8xbf16>
    %cst = arith.constant dense<0.000000e+00> : vector<8x8xf32>
    %7 = tpu.matmul %1, %6, %cst {dimension_numbers = #tpu.dot_dimension_numbers<[1], [0], [0], [1], [0, 0, 1, 1], [], []>} : vector<8x128xbf16>, vector<128x8xbf16>, vector<8x8xf32> -> vector<8x8xf32>
    %cst_8 = arith.constant 0.0883883461 : f32
    %8 = vector.broadcast %cst_8 : f32 to vector<8x8xf32>
    %9 = arith.mulf %7, %8 : vector<8x8xf32>
    %cst_9 = arith.constant dense<0xFF800000> : vector<8xf32>
    %10 = vector.multi_reduction <maximumf>, %9, %cst_9 [1] : vector<8x8xf32> to vector<8xf32>
    %11 = vector.shape_cast %10 : vector<8xf32> to vector<8x1xf32>
    %12 = vector.broadcast %11 : vector<8x1xf32> to vector<8x8xf32>
    %13 = arith.subf %9, %12 : vector<8x8xf32>
    %14 = math.exp %13 : vector<8x8xf32>
    %cst_10 = arith.constant dense<0.000000e+00> : vector<8xf32>
    %15 = vector.multi_reduction <add>, %14, %cst_10 [1] : vector<8x8xf32> to vector<8xf32>
    %16 = vector.shape_cast %15 : vector<8xf32> to vector<8x1xf32>
    %17 = tpu.reciprocal %16 {approx = true} : vector<8x1xf32> -> vector<8x1xf32>
    %18 = vector.broadcast %17 : vector<8x1xf32> to vector<8x8xf32>
    %19 = arith.mulf %14, %18 : vector<8x8xf32>
    %20 = arith.truncf %19 : vector<8x8xf32> to vector<8x8xbf16>
    %cst_11 = arith.constant dense<0.000000e+00> : vector<8x128xf32>
    %21 = tpu.matmul %20, %5, %cst_11 {dimension_numbers = #tpu.dot_dimension_numbers<[1], [0], [0], [1], [0, 0, 1, 1], [], []>} : vector<8x8xbf16>, vector<8x128xbf16>, vector<8x128xf32> -> vector<8x128xf32>
    %cst_12 = arith.constant dense<0.000000e+00> : vector<128xf32>
    %22 = vector.multi_reduction <add>, %21, %cst_12 [0] : vector<8x128xf32> to vector<128xf32>
    %23 = vector.shape_cast %22 : vector<128xf32> to vector<1x128xf32>
    %cst_13 = arith.constant 1.250000e-01 : f32
    %24 = vector.broadcast %cst_13 : f32 to vector<1x128xf32>
    %25 = arith.mulf %23, %24 : vector<1x128xf32>
    %c0_14 = arith.constant 0 : index
    %c0_15 = arith.constant 0 : index
    %c0_16 = arith.constant 0 : index
    %26 = vector.load %arg4[%c0_14, %c0_15, %c0_16] : memref<1x1x128xf32, #tpu.memory_space<vmem>>, vector<1x1x128xf32>
    %27 = vector.shape_cast %26 : vector<1x1x128xf32> to vector<1x128xf32>
    %28 = vector.shape_cast %25 : vector<1x128xf32> to vector<1x1x128xf32>
    tpu.vector_store %arg4[%c0_14, %c0_15, %c0_16], %28 {strides = array<i32>} : memref<1x1x128xf32, #tpu.memory_space<vmem>>, vector<1x1x128xf32>,
    return
  }
  func.func @transform_0(%arg0: i32) -> (i32, i32, i32) {
    %c0_i32 = arith.constant 0 : i32
    %c0_i32_0 = arith.constant 0 : i32
    %c0_i32_1 = arith.constant 0 : i32
    return %arg0, %c0_i32, %c0_i32_0 : i32, i32, i32
  }
  func.func @transform_1(%arg0: i32) -> (i32, i32, i32) {
    %c0_i32 = arith.constant 0 : i32
    %c0_i32_0 = arith.constant 0 : i32
    %c0_i32_1 = arith.constant 0 : i32
    return %arg0, %c0_i32, %c0_i32_0 : i32, i32, i32
  }
  func.func @transform_2(%arg0: i32) -> (i32, i32, i32) {
    %c0_i32 = arith.constant 0 : i32
    %c0_i32_0 = arith.constant 0 : i32
    %c0_i32_1 = arith.constant 0 : i32
    return %arg0, %c0_i32, %c0_i32_0 : i32, i32, i32
  }
  func.func @transform_3(%arg0: i32) -> (i32, i32, i32) {
    %c0_i32 = arith.constant 0 : i32
    %c0_i32_0 = arith.constant 0 : i32
    %c0_i32_1 = arith.constant 0 : i32
    return %arg0, %c0_i32, %c0_i32_0 : i32, i32, i32
  }
}

module attributes {stable_mosaic.version = 11 : i64} {
  func.func @_encode_pool_kernel(%arg0: i32, %arg1: i32, %arg2: i32, %arg3: memref<1x1x8x128xbf16, #tpu.memory_space<vmem>>, %arg4: memref<1x128x128xbf16, #tpu.memory_space<vmem>>, %arg5: memref<1x1x128xf32, #tpu.memory_space<vmem>>, %arg6: memref<1x1x8x128xbf16, #tpu.memory_space<vmem>>, %arg7: memref<1x1x1x128xf32, #tpu.memory_space<vmem>>) attributes {dimension_semantics = [#tpu.dimension_semantics<parallel>, #tpu.dimension_semantics<parallel>, #tpu.dimension_semantics<arbitrary>], iteration_bounds = array<i64: 2, 2, 1>, scalar_prefetch = 0 : i64, scratch_operands = 0 : i64, tpu.core_type = #tpu.core_type<tc>, window_params = [{transform_indices = @transform_0, window_bounds = array<i64: 1, 1, 8, 128>}, {transform_indices = @transform_1, window_bounds = array<i64: 1, 128, 128>}, {transform_indices = @transform_2, window_bounds = array<i64: 1, 1, 128>}, {transform_indices = @transform_3, window_bounds = array<i64: 1, 1, 8, 128>}, {transform_indices = @transform_4, window_bounds = array<i64: 1, 1, 1, 128>}]} {
    %c0_i32 = arith.constant 0 : i32
    %0 = arith.cmpi eq, %arg2, %c0_i32 : i32
    %1 = arith.extui %0 : i1 to i32
    %c0_i32_0 = arith.constant 0 : i32
    %2 = arith.cmpi ne, %1, %c0_i32_0 : i32
    scf.if %2 {
      %cst_24 = arith.constant 0.000000e+00 : f32
      %27 = vector.broadcast %cst_24 : f32 to vector<1x128xf32>
      %c0_25 = arith.constant 0 : index
      %c0_26 = arith.constant 0 : index
      %c0_27 = arith.constant 0 : index
      %c0_28 = arith.constant 0 : index
      %28 = vector.load %arg7[%c0_25, %c0_26, %c0_27, %c0_28] : memref<1x1x1x128xf32, #tpu.memory_space<vmem>>, vector<1x1x1x128xf32>
      %29 = vector.shape_cast %28 : vector<1x1x1x128xf32> to vector<1x128xf32>
      %30 = vector.shape_cast %27 : vector<1x128xf32> to vector<1x1x1x128xf32>
      tpu.vector_store %arg7[%c0_25, %c0_26, %c0_27, %c0_28], %30 {strides = array<i32>} : memref<1x1x1x128xf32, #tpu.memory_space<vmem>>, vector<1x1x1x128xf32>,
    } else {
    }
    %c0 = arith.constant 0 : index
    %c0_1 = arith.constant 0 : index
    %c0_2 = arith.constant 0 : index
    %c0_3 = arith.constant 0 : index
    %3 = vector.load %arg3[%c0, %c0_1, %c0_2, %c0_3] : memref<1x1x8x128xbf16, #tpu.memory_space<vmem>>, vector<1x1x8x128xbf16>
    %4 = vector.shape_cast %3 : vector<1x1x8x128xbf16> to vector<8x128xbf16>
    %c0_4 = arith.constant 0 : index
    %c0_5 = arith.constant 0 : index
    %c0_6 = arith.constant 0 : index
    %5 = vector.load %arg4[%c0_4, %c0_5, %c0_6] : memref<1x128x128xbf16, #tpu.memory_space<vmem>>, vector<1x128x128xbf16>
    %6 = vector.shape_cast %5 : vector<1x128x128xbf16> to vector<128x128xbf16>
    %cst = arith.constant dense<0.000000e+00> : vector<8x128xf32>
    %7 = tpu.matmul %4, %6, %cst {dimension_numbers = #tpu.dot_dimension_numbers<[1], [0], [0], [1], [0, 0, 1, 1], [], []>} : vector<8x128xbf16>, vector<128x128xbf16>, vector<8x128xf32> -> vector<8x128xf32>
    %c0_7 = arith.constant 0 : index
    %c0_8 = arith.constant 0 : index
    %c0_9 = arith.constant 0 : index
    %8 = vector.load %arg5[%c0_7, %c0_8, %c0_9] : memref<1x1x128xf32, #tpu.memory_space<vmem>>, vector<1x1x128xf32>
    %9 = vector.shape_cast %8 : vector<1x1x128xf32> to vector<1x128xf32>
    %10 = vector.broadcast %9 : vector<1x128xf32> to vector<8x128xf32>
    %11 = arith.addf %7, %10 : vector<8x128xf32>
    %12 = math.tanh %11 : vector<8x128xf32>
    %13 = arith.truncf %12 : vector<8x128xf32> to vector<8x128xbf16>
    %c0_10 = arith.constant 0 : index
    %c0_11 = arith.constant 0 : index
    %c0_12 = arith.constant 0 : index
    %c0_13 = arith.constant 0 : index
    %14 = vector.load %arg6[%c0_10, %c0_11, %c0_12, %c0_13] : memref<1x1x8x128xbf16, #tpu.memory_space<vmem>>, vector<1x1x8x128xbf16>
    %15 = vector.shape_cast %14 : vector<1x1x8x128xbf16> to vector<8x128xbf16>
    %16 = vector.shape_cast %13 : vector<8x128xbf16> to vector<1x1x8x128xbf16>
    tpu.vector_store %arg6[%c0_10, %c0_11, %c0_12, %c0_13], %16 {strides = array<i32>} : memref<1x1x8x128xbf16, #tpu.memory_space<vmem>>, vector<1x1x8x128xbf16>,
    %c0_14 = arith.constant 0 : index
    %c0_15 = arith.constant 0 : index
    %c0_16 = arith.constant 0 : index
    %c0_17 = arith.constant 0 : index
    %17 = vector.load %arg7[%c0_14, %c0_15, %c0_16, %c0_17] : memref<1x1x1x128xf32, #tpu.memory_space<vmem>>, vector<1x1x1x128xf32>
    %18 = vector.shape_cast %17 : vector<1x1x1x128xf32> to vector<1x128xf32>
    %cst_18 = arith.constant dense<0.000000e+00> : vector<128xf32>
    %19 = vector.multi_reduction <add>, %12, %cst_18 [0] : vector<8x128xf32> to vector<128xf32>
    %20 = vector.shape_cast %19 : vector<128xf32> to vector<1x128xf32>
    %cst_19 = arith.constant 1.250000e-01 : f32
    %21 = vector.broadcast %cst_19 : f32 to vector<1x128xf32>
    %22 = arith.mulf %20, %21 : vector<1x128xf32>
    %23 = arith.addf %18, %22 : vector<1x128xf32>
    %c0_20 = arith.constant 0 : index
    %c0_21 = arith.constant 0 : index
    %c0_22 = arith.constant 0 : index
    %c0_23 = arith.constant 0 : index
    %24 = vector.load %arg7[%c0_20, %c0_21, %c0_22, %c0_23] : memref<1x1x1x128xf32, #tpu.memory_space<vmem>>, vector<1x1x1x128xf32>
    %25 = vector.shape_cast %24 : vector<1x1x1x128xf32> to vector<1x128xf32>
    %26 = vector.shape_cast %23 : vector<1x128xf32> to vector<1x1x1x128xf32>
    tpu.vector_store %arg7[%c0_20, %c0_21, %c0_22, %c0_23], %26 {strides = array<i32>} : memref<1x1x1x128xf32, #tpu.memory_space<vmem>>, vector<1x1x1x128xf32>,
    return
  }
  func.func @transform_0(%arg0: i32, %arg1: i32, %arg2: i32) -> (i32, i32, i32, i32) {
    %c0_i32 = arith.constant 0 : i32
    %c0_i32_0 = arith.constant 0 : i32
    return %arg0, %arg1, %arg2, %c0_i32 : i32, i32, i32, i32
  }
  func.func @transform_1(%arg0: i32, %arg1: i32, %arg2: i32) -> (i32, i32, i32) {
    %c0_i32 = arith.constant 0 : i32
    %c0_i32_0 = arith.constant 0 : i32
    %c0_i32_1 = arith.constant 0 : i32
    return %arg0, %c0_i32, %c0_i32_0 : i32, i32, i32
  }
  func.func @transform_2(%arg0: i32, %arg1: i32, %arg2: i32) -> (i32, i32, i32) {
    %c0_i32 = arith.constant 0 : i32
    %c0_i32_0 = arith.constant 0 : i32
    %c0_i32_1 = arith.constant 0 : i32
    return %arg0, %c0_i32, %c0_i32_0 : i32, i32, i32
  }
  func.func @transform_3(%arg0: i32, %arg1: i32, %arg2: i32) -> (i32, i32, i32, i32) {
    %c0_i32 = arith.constant 0 : i32
    %c0_i32_0 = arith.constant 0 : i32
    return %arg0, %arg1, %arg2, %c0_i32 : i32, i32, i32, i32
  }
  func.func @transform_4(%arg0: i32, %arg1: i32, %arg2: i32) -> (i32, i32, i32, i32) {
    %c0_i32 = arith.constant 0 : i32
    %c0_i32_0 = arith.constant 0 : i32
    %c0_i32_1 = arith.constant 0 : i32
    return %arg0, %arg1, %c0_i32, %c0_i32_0 : i32, i32, i32, i32
  }
}

module attributes {stable_mosaic.version = 11 : i64} {
  func.func @_latent_kernel(%arg0: i32, %arg1: memref<2x128xf32, #tpu.memory_space<vmem>>, %arg2: memref<2x128xf32, #tpu.memory_space<vmem>>, %arg3: memref<2x128xf32, #tpu.memory_space<vmem>>, %arg4: memref<2x64xf32, #tpu.memory_space<vmem>>, %arg5: memref<128x128xf32, #tpu.memory_space<vmem>>, %arg6: memref<1x128xf32, #tpu.memory_space<vmem>>, %arg7: memref<128x128xf32, #tpu.memory_space<vmem>>, %arg8: memref<128x128xf32, #tpu.memory_space<vmem>>, %arg9: memref<1x128xf32, #tpu.memory_space<vmem>>, %arg10: memref<2x128xf32, #tpu.memory_space<vmem>>) attributes {dimension_semantics = [#tpu.dimension_semantics<arbitrary>], iteration_bounds = array<i64: 1>, scalar_prefetch = 0 : i64, scratch_operands = 0 : i64, tpu.core_type = #tpu.core_type<tc>, window_params = [{pipeline_mode = #tpu.pipeline_mode<synchronous>, transform_indices = @transform_0, window_bounds = array<i64: 2, 128>}, {pipeline_mode = #tpu.pipeline_mode<synchronous>, transform_indices = @transform_1, window_bounds = array<i64: 2, 128>}, {pipeline_mode = #tpu.pipeline_mode<synchronous>, transform_indices = @transform_2, window_bounds = array<i64: 2, 128>}, {pipeline_mode = #tpu.pipeline_mode<synchronous>, transform_indices = @transform_3, window_bounds = array<i64: 2, 64>}, {pipeline_mode = #tpu.pipeline_mode<synchronous>, transform_indices = @transform_4, window_bounds = array<i64: 128, 128>}, {pipeline_mode = #tpu.pipeline_mode<synchronous>, transform_indices = @transform_5, window_bounds = array<i64: 1, 128>}, {pipeline_mode = #tpu.pipeline_mode<synchronous>, transform_indices = @transform_6, window_bounds = array<i64: 128, 128>}, {pipeline_mode = #tpu.pipeline_mode<synchronous>, transform_indices = @transform_7, window_bounds = array<i64: 128, 128>}, {pipeline_mode = #tpu.pipeline_mode<synchronous>, transform_indices = @transform_8, window_bounds = array<i64: 1, 128>}, {pipeline_mode = #tpu.pipeline_mode<synchronous>, transform_indices = @transform_9, window_bounds = array<i64: 2, 128>}]} {
    %c0 = arith.constant 0 : index
    %c0_0 = arith.constant 0 : index
    %0 = vector.load %arg1[%c0, %c0_0] : memref<2x128xf32, #tpu.memory_space<vmem>>, vector<2x128xf32>
    %c0_1 = arith.constant 0 : index
    %c0_2 = arith.constant 0 : index
    %1 = vector.load %arg5[%c0_1, %c0_2] : memref<128x128xf32, #tpu.memory_space<vmem>>, vector<128x128xf32>
    %cst = arith.constant dense<0.000000e+00> : vector<2x128xf32>
    %2 = tpu.matmul %0, %1, %cst {dimension_numbers = #tpu.dot_dimension_numbers<[1], [0], [0], [1], [0, 0, 1, 1], [], []>} : vector<2x128xf32>, vector<128x128xf32>, vector<2x128xf32> -> vector<2x128xf32>
    %c0_3 = arith.constant 0 : index
    %c0_4 = arith.constant 0 : index
    %3 = vector.load %arg6[%c0_3, %c0_4] : memref<1x128xf32, #tpu.memory_space<vmem>>, vector<1x128xf32>
    %4 = vector.broadcast %3 : vector<1x128xf32> to vector<2x128xf32>
    %5 = arith.addf %2, %4 : vector<2x128xf32>
    %c0_5 = arith.constant 0 : index
    %c0_6 = arith.constant 0 : index
    %6 = vector.load %arg2[%c0_5, %c0_6] : memref<2x128xf32, #tpu.memory_space<vmem>>, vector<2x128xf32>
    %c0_7 = arith.constant 0 : index
    %c0_8 = arith.constant 0 : index
    %7 = vector.load %arg7[%c0_7, %c0_8] : memref<128x128xf32, #tpu.memory_space<vmem>>, vector<128x128xf32>
    %cst_9 = arith.constant dense<0.000000e+00> : vector<2x128xf32>
    %8 = tpu.matmul %6, %7, %cst_9 {dimension_numbers = #tpu.dot_dimension_numbers<[1], [0], [0], [1], [0, 0, 1, 1], [], []>} : vector<2x128xf32>, vector<128x128xf32>, vector<2x128xf32> -> vector<2x128xf32>
    %c0_10 = arith.constant 0 : index
    %c0_11 = arith.constant 0 : index
    %9 = vector.load %arg3[%c0_10, %c0_11] : memref<2x128xf32, #tpu.memory_space<vmem>>, vector<2x128xf32>
    %c0_12 = arith.constant 0 : index
    %c0_13 = arith.constant 0 : index
    %10 = vector.load %arg8[%c0_12, %c0_13] : memref<128x128xf32, #tpu.memory_space<vmem>>, vector<128x128xf32>
    %cst_14 = arith.constant dense<0.000000e+00> : vector<2x128xf32>
    %11 = tpu.matmul %9, %10, %cst_14 {dimension_numbers = #tpu.dot_dimension_numbers<[1], [0], [0], [1], [0, 0, 1, 1], [], []>} : vector<2x128xf32>, vector<128x128xf32>, vector<2x128xf32> -> vector<2x128xf32>
    %12 = arith.addf %8, %11 : vector<2x128xf32>
    %c0_15 = arith.constant 0 : index
    %c0_16 = arith.constant 0 : index
    %13 = vector.load %arg9[%c0_15, %c0_16] : memref<1x128xf32, #tpu.memory_space<vmem>>, vector<1x128xf32>
    %14 = vector.broadcast %13 : vector<1x128xf32> to vector<2x128xf32>
    %15 = arith.addf %12, %14 : vector<2x128xf32>
    %16 = vector.extract_strided_slice %5 {offsets = [0, 0], sizes = [2, 64], strides = [1, 1]} : vector<2x128xf32> to vector<2x64xf32>
    %17 = vector.extract_strided_slice %5 {offsets = [0, 64], sizes = [2, 64], strides = [1, 1]} : vector<2x128xf32> to vector<2x64xf32>
    %18 = vector.extract_strided_slice %15 {offsets = [0, 0], sizes = [2, 64], strides = [1, 1]} : vector<2x128xf32> to vector<2x64xf32>
    %19 = vector.extract_strided_slice %15 {offsets = [0, 64], sizes = [2, 64], strides = [1, 1]} : vector<2x128xf32> to vector<2x64xf32>
    %20 = math.exp %19 : vector<2x64xf32>
    %cst_17 = arith.constant 0.000000e+00 : f32
    %21 = vector.broadcast %cst_17 : f32 to vector<2x64xf32>
    %22 = arith.subf %21, %17 : vector<2x64xf32>
    %23 = math.exp %22 : vector<2x64xf32>
    %24 = arith.subf %17, %19 : vector<2x64xf32>
    %cst_18 = arith.constant 5.000000e-01 : f32
    %25 = vector.broadcast %cst_18 : f32 to vector<2x64xf32>
    %26 = arith.mulf %25, %24 : vector<2x64xf32>
    %27 = arith.subf %18, %16 : vector<2x64xf32>
    %28 = arith.mulf %27, %27 : vector<2x64xf32>
    %29 = arith.addf %20, %28 : vector<2x64xf32>
    %cst_19 = arith.constant 5.000000e-01 : f32
    %30 = vector.broadcast %cst_19 : f32 to vector<2x64xf32>
    %31 = arith.mulf %30, %29 : vector<2x64xf32>
    %32 = arith.mulf %31, %23 : vector<2x64xf32>
    %33 = arith.addf %26, %32 : vector<2x64xf32>
    %cst_20 = arith.constant 5.000000e-01 : f32
    %34 = vector.broadcast %cst_20 : f32 to vector<2x64xf32>
    %35 = arith.subf %33, %34 : vector<2x64xf32>
    %cst_21 = arith.constant 5.000000e-01 : f32
    %36 = vector.broadcast %cst_21 : f32 to vector<2x64xf32>
    %37 = arith.mulf %36, %19 : vector<2x64xf32>
    %38 = math.exp %37 : vector<2x64xf32>
    %c0_22 = arith.constant 0 : index
    %c0_23 = arith.constant 0 : index
    %39 = vector.load %arg4[%c0_22, %c0_23] : memref<2x64xf32, #tpu.memory_space<vmem>>, vector<2x64xf32>
    %40 = arith.mulf %38, %39 : vector<2x64xf32>
    %41 = arith.addf %18, %40 : vector<2x64xf32>
    %42 = tpu.concatenate %35, %41 in 1 : vector<2x64xf32>, vector<2x64xf32> -> vector<2x128xf32>
    %c0_24 = arith.constant 0 : index
    %c0_25 = arith.constant 0 : index
    %43 = vector.load %arg10[%c0_24, %c0_25] : memref<2x128xf32, #tpu.memory_space<vmem>>, vector<2x128xf32>
    tpu.vector_store %arg10[%c0_24, %c0_25], %42 {strides = array<i32>} : memref<2x128xf32, #tpu.memory_space<vmem>>, vector<2x128xf32>,
    return
  }
  func.func @transform_0(%arg0: i32) -> (i32, i32) {
    %c0_i32 = arith.constant 0 : i32
    %c0_i32_0 = arith.constant 0 : i32
    %c0_i32_1 = arith.constant 0 : i32
    return %c0_i32, %c0_i32_0 : i32, i32
  }
  func.func @transform_1(%arg0: i32) -> (i32, i32) {
    %c0_i32 = arith.constant 0 : i32
    %c0_i32_0 = arith.constant 0 : i32
    %c0_i32_1 = arith.constant 0 : i32
    return %c0_i32, %c0_i32_0 : i32, i32
  }
  func.func @transform_2(%arg0: i32) -> (i32, i32) {
    %c0_i32 = arith.constant 0 : i32
    %c0_i32_0 = arith.constant 0 : i32
    %c0_i32_1 = arith.constant 0 : i32
    return %c0_i32, %c0_i32_0 : i32, i32
  }
  func.func @transform_3(%arg0: i32) -> (i32, i32) {
    %c0_i32 = arith.constant 0 : i32
    %c0_i32_0 = arith.constant 0 : i32
    %c0_i32_1 = arith.constant 0 : i32
    return %c0_i32, %c0_i32_0 : i32, i32
  }
  func.func @transform_4(%arg0: i32) -> (i32, i32) {
    %c0_i32 = arith.constant 0 : i32
    %c0_i32_0 = arith.constant 0 : i32
    %c0_i32_1 = arith.constant 0 : i32
    return %c0_i32, %c0_i32_0 : i32, i32
  }
  func.func @transform_5(%arg0: i32) -> (i32, i32) {
    %c0_i32 = arith.constant 0 : i32
    %c0_i32_0 = arith.constant 0 : i32
    %c0_i32_1 = arith.constant 0 : i32
    return %c0_i32, %c0_i32_0 : i32, i32
  }
  func.func @transform_6(%arg0: i32) -> (i32, i32) {
    %c0_i32 = arith.constant 0 : i32
    %c0_i32_0 = arith.constant 0 : i32
    %c0_i32_1 = arith.constant 0 : i32
    return %c0_i32, %c0_i32_0 : i32, i32
  }
  func.func @transform_7(%arg0: i32) -> (i32, i32) {
    %c0_i32 = arith.constant 0 : i32
    %c0_i32_0 = arith.constant 0 : i32
    %c0_i32_1 = arith.constant 0 : i32
    return %c0_i32, %c0_i32_0 : i32, i32
  }
  func.func @transform_8(%arg0: i32) -> (i32, i32) {
    %c0_i32 = arith.constant 0 : i32
    %c0_i32_0 = arith.constant 0 : i32
    %c0_i32_1 = arith.constant 0 : i32
    return %c0_i32, %c0_i32_0 : i32, i32
  }
  func.func @transform_9(%arg0: i32) -> (i32, i32) {
    %c0_i32 = arith.constant 0 : i32
    %c0_i32_0 = arith.constant 0 : i32
    %c0_i32_1 = arith.constant 0 : i32
    return %c0_i32, %c0_i32_0 : i32, i32
  }
}

module attributes {stable_mosaic.version = 11 : i64} {
  func.func @_decoder_kernel(%arg0: i32, %arg1: i32, %arg2: memref<1x8x128xbf16, #tpu.memory_space<vmem>>, %arg3: memref<1x1x64xf32, #tpu.memory_space<vmem>>, %arg4: memref<128x128xbf16, #tpu.memory_space<vmem>>, %arg5: memref<64x128xbf16, #tpu.memory_space<vmem>>, %arg6: memref<1x128xf32, #tpu.memory_space<vmem>>, %arg7: memref<128x256xbf16, #tpu.memory_space<vmem>>, %arg8: memref<1x256xf32, #tpu.memory_space<vmem>>, %arg9: memref<1x8x256xf32, #tpu.memory_space<vmem>>, %arg10: memref<1x1x128xf32, #tpu.memory_space<vmem>>) attributes {dimension_semantics = [#tpu.dimension_semantics<parallel>, #tpu.dimension_semantics<arbitrary>], iteration_bounds = array<i64: 2, 1>, scalar_prefetch = 0 : i64, scratch_operands = 0 : i64, tpu.core_type = #tpu.core_type<tc>, window_params = [{transform_indices = @transform_0, window_bounds = array<i64: 1, 8, 128>}, {transform_indices = @transform_1, window_bounds = array<i64: 1, 1, 64>}, {pipeline_mode = #tpu.pipeline_mode<synchronous>, transform_indices = @transform_2, window_bounds = array<i64: 128, 128>}, {pipeline_mode = #tpu.pipeline_mode<synchronous>, transform_indices = @transform_3, window_bounds = array<i64: 64, 128>}, {pipeline_mode = #tpu.pipeline_mode<synchronous>, transform_indices = @transform_4, window_bounds = array<i64: 1, 128>}, {pipeline_mode = #tpu.pipeline_mode<synchronous>, transform_indices = @transform_5, window_bounds = array<i64: 128, 256>}, {pipeline_mode = #tpu.pipeline_mode<synchronous>, transform_indices = @transform_6, window_bounds = array<i64: 1, 256>}, {transform_indices = @transform_7, window_bounds = array<i64: 1, 8, 256>}, {transform_indices = @transform_8, window_bounds = array<i64: 1, 1, 128>}]} {
    %c0 = arith.constant 0 : index
    %c0_0 = arith.constant 0 : index
    %c0_1 = arith.constant 0 : index
    %0 = vector.load %arg2[%c0, %c0_0, %c0_1] : memref<1x8x128xbf16, #tpu.memory_space<vmem>>, vector<1x8x128xbf16>
    %1 = vector.shape_cast %0 : vector<1x8x128xbf16> to vector<8x128xbf16>
    %c0_2 = arith.constant 0 : index
    %c0_3 = arith.constant 0 : index
    %c0_4 = arith.constant 0 : index
    %2 = vector.load %arg3[%c0_2, %c0_3, %c0_4] : memref<1x1x64xf32, #tpu.memory_space<vmem>>, vector<1x1x64xf32>
    %3 = vector.shape_cast %2 : vector<1x1x64xf32> to vector<1x64xf32>
    %4 = arith.truncf %3 : vector<1x64xf32> to vector<1x64xbf16>
    %c0_5 = arith.constant 0 : index
    %c0_6 = arith.constant 0 : index
    %5 = vector.load %arg5[%c0_5, %c0_6] : memref<64x128xbf16, #tpu.memory_space<vmem>>, vector<64x128xbf16>
    %cst = arith.constant dense<0.000000e+00> : vector<1x128xf32>
    %6 = tpu.matmul %4, %5, %cst {dimension_numbers = #tpu.dot_dimension_numbers<[1], [0], [0], [1], [0, 0, 1, 1], [], []>} : vector<1x64xbf16>, vector<64x128xbf16>, vector<1x128xf32> -> vector<1x128xf32>
    %c0_7 = arith.constant 0 : index
    %c0_8 = arith.constant 0 : index
    %7 = vector.load %arg4[%c0_7, %c0_8] : memref<128x128xbf16, #tpu.memory_space<vmem>>, vector<128x128xbf16>
    %cst_9 = arith.constant dense<0.000000e+00> : vector<8x128xf32>
    %8 = tpu.matmul %1, %7, %cst_9 {dimension_numbers = #tpu.dot_dimension_numbers<[1], [0], [0], [1], [0, 0, 1, 1], [], []>} : vector<8x128xbf16>, vector<128x128xbf16>, vector<8x128xf32> -> vector<8x128xf32>
    %9 = vector.broadcast %6 : vector<1x128xf32> to vector<8x128xf32>
    %10 = arith.addf %8, %9 : vector<8x128xf32>
    %c0_10 = arith.constant 0 : index
    %c0_11 = arith.constant 0 : index
    %11 = vector.load %arg6[%c0_10, %c0_11] : memref<1x128xf32, #tpu.memory_space<vmem>>, vector<1x128xf32>
    %12 = vector.broadcast %11 : vector<1x128xf32> to vector<8x128xf32>
    %13 = arith.addf %10, %12 : vector<8x128xf32>
    %14 = math.tanh %13 : vector<8x128xf32>
    %15 = arith.truncf %14 : vector<8x128xf32> to vector<8x128xbf16>
    %c0_12 = arith.constant 0 : index
    %c0_13 = arith.constant 0 : index
    %16 = vector.load %arg7[%c0_12, %c0_13] : memref<128x256xbf16, #tpu.memory_space<vmem>>, vector<128x256xbf16>
    %cst_14 = arith.constant dense<0.000000e+00> : vector<8x256xf32>
    %17 = tpu.matmul %15, %16, %cst_14 {dimension_numbers = #tpu.dot_dimension_numbers<[1], [0], [0], [1], [0, 0, 1, 1], [], []>} : vector<8x128xbf16>, vector<128x256xbf16>, vector<8x256xf32> -> vector<8x256xf32>
    %c0_15 = arith.constant 0 : index
    %c0_16 = arith.constant 0 : index
    %18 = vector.load %arg8[%c0_15, %c0_16] : memref<1x256xf32, #tpu.memory_space<vmem>>, vector<1x256xf32>
    %19 = vector.broadcast %18 : vector<1x256xf32> to vector<8x256xf32>
    %20 = arith.addf %17, %19 : vector<8x256xf32>
    %cst_17 = arith.constant dense<0xFF800000> : vector<8xf32>
    %21 = vector.multi_reduction <maximumf>, %20, %cst_17 [1] : vector<8x256xf32> to vector<8xf32>
    %22 = vector.shape_cast %21 : vector<8xf32> to vector<8x1xf32>
    %23 = vector.broadcast %22 : vector<8x1xf32> to vector<8x256xf32>
    %24 = arith.subf %20, %23 : vector<8x256xf32>
    %25 = math.exp %24 : vector<8x256xf32>
    %cst_18 = arith.constant dense<0.000000e+00> : vector<8xf32>
    %26 = vector.multi_reduction <add>, %25, %cst_18 [1] : vector<8x256xf32> to vector<8xf32>
    %27 = vector.shape_cast %26 : vector<8xf32> to vector<8x1xf32>
    %28 = math.log %27 : vector<8x1xf32>
    %29 = vector.broadcast %28 : vector<8x1xf32> to vector<8x256xf32>
    %30 = arith.subf %24, %29 : vector<8x256xf32>
    %c0_19 = arith.constant 0 : index
    %c0_20 = arith.constant 0 : index
    %c0_21 = arith.constant 0 : index
    %31 = vector.load %arg9[%c0_19, %c0_20, %c0_21] : memref<1x8x256xf32, #tpu.memory_space<vmem>>, vector<1x8x256xf32>
    %32 = vector.shape_cast %31 : vector<1x8x256xf32> to vector<8x256xf32>
    %33 = vector.shape_cast %30 : vector<8x256xf32> to vector<1x8x256xf32>
    tpu.vector_store %arg9[%c0_19, %c0_20, %c0_21], %33 {strides = array<i32>} : memref<1x8x256xf32, #tpu.memory_space<vmem>>, vector<1x8x256xf32>,
    %c0_i32 = arith.constant 0 : i32
    %34 = arith.cmpi eq, %arg1, %c0_i32 : i32
    %35 = arith.extui %34 : i1 to i32
    %c0_i32_22 = arith.constant 0 : i32
    %36 = arith.cmpi ne, %35, %c0_i32_22 : i32
    scf.if %36 {
      %37 = vector.extract_strided_slice %14 {offsets = [7, 0], sizes = [1, 128], strides = [1, 1]} : vector<8x128xf32> to vector<1x128xf32>
      %c0_23 = arith.constant 0 : index
      %c0_24 = arith.constant 0 : index
      %c0_25 = arith.constant 0 : index
      %38 = vector.load %arg10[%c0_23, %c0_24, %c0_25] : memref<1x1x128xf32, #tpu.memory_space<vmem>>, vector<1x1x128xf32>
      %39 = vector.shape_cast %38 : vector<1x1x128xf32> to vector<1x128xf32>
      %40 = vector.shape_cast %37 : vector<1x128xf32> to vector<1x1x128xf32>
      tpu.vector_store %arg10[%c0_23, %c0_24, %c0_25], %40 {strides = array<i32>} : memref<1x1x128xf32, #tpu.memory_space<vmem>>, vector<1x1x128xf32>,
    } else {
    }
    return
  }
  func.func @transform_0(%arg0: i32, %arg1: i32) -> (i32, i32, i32) {
    %c0_i32 = arith.constant 0 : i32
    %c0_i32_0 = arith.constant 0 : i32
    return %arg0, %arg1, %c0_i32 : i32, i32, i32
  }
  func.func @transform_1(%arg0: i32, %arg1: i32) -> (i32, i32, i32) {
    %c0_i32 = arith.constant 0 : i32
    %c0_i32_0 = arith.constant 0 : i32
    %c0_i32_1 = arith.constant 0 : i32
    return %arg0, %c0_i32, %c0_i32_0 : i32, i32, i32
  }
  func.func @transform_2(%arg0: i32, %arg1: i32) -> (i32, i32) {
    %c0_i32 = arith.constant 0 : i32
    %c0_i32_0 = arith.constant 0 : i32
    %c0_i32_1 = arith.constant 0 : i32
    return %c0_i32, %c0_i32_0 : i32, i32
  }
  func.func @transform_3(%arg0: i32, %arg1: i32) -> (i32, i32) {
    %c0_i32 = arith.constant 0 : i32
    %c0_i32_0 = arith.constant 0 : i32
    %c0_i32_1 = arith.constant 0 : i32
    return %c0_i32, %c0_i32_0 : i32, i32
  }
  func.func @transform_4(%arg0: i32, %arg1: i32) -> (i32, i32) {
    %c0_i32 = arith.constant 0 : i32
    %c0_i32_0 = arith.constant 0 : i32
    %c0_i32_1 = arith.constant 0 : i32
    return %c0_i32, %c0_i32_0 : i32, i32
  }
  func.func @transform_5(%arg0: i32, %arg1: i32) -> (i32, i32) {
    %c0_i32 = arith.constant 0 : i32
    %c0_i32_0 = arith.constant 0 : i32
    %c0_i32_1 = arith.constant 0 : i32
    return %c0_i32, %c0_i32_0 : i32, i32
  }
  func.func @transform_6(%arg0: i32, %arg1: i32) -> (i32, i32) {
    %c0_i32 = arith.constant 0 : i32
    %c0_i32_0 = arith.constant 0 : i32
    %c0_i32_1 = arith.constant 0 : i32
    return %c0_i32, %c0_i32_0 : i32, i32
  }
  func.func @transform_7(%arg0: i32, %arg1: i32) -> (i32, i32, i32) {
    %c0_i32 = arith.constant 0 : i32
    %c0_i32_0 = arith.constant 0 : i32
    return %arg0, %arg1, %c0_i32 : i32, i32, i32
  }
  func.func @transform_8(%arg0: i32, %arg1: i32) -> (i32, i32, i32) {
    %c0_i32 = arith.constant 0 : i32
    %c0_i32_0 = arith.constant 0 : i32
    %c0_i32_1 = arith.constant 0 : i32
    return %arg0, %c0_i32, %c0_i32_0 : i32, i32, i32
  }
}

</mosaic_0001>

<llo_original>
// kernel: cvae_forward.5
$region0: #{cvae_forward.5}
  #allocation0 [shape = 'u32[]', space=smem, size = 0x4, offset = 0x4, fixed_abs, tag = 'smem constant byte address 0x4 - core index']
  #allocation1 [shape = 'u32[144,128]{1,0:T(1,128)}', space=vmem, size = 0x12000, scoped, tag = 'internal scratch']
  %s0 = inlined_call_operand.vmem [shape: bf16[2,8,128], index: 0, kind: input, shape index: {}]
  %s1 = inlined_call_operand.vmem [shape: bf16[2,8,128], index: 1, kind: input, shape index: {}, may-alias: {1,2}]
  %s2 = inlined_call_operand.vmem [shape: bf16[2,8,128], index: 2, kind: input, shape index: {}, may-alias: {1,2}]
  %s3 = inlined_call_operand.vmem [shape: f32[2,1,128], index: 3, kind: output, shape index: {}]
  %s4 = sld [smem:[#allocation0]]
  $region45: #{cvae_forward.5} parent=0
    _
  %s6 = ssub.s32 1, %s4
  %s7 = scalar_select 0, %s6, %s4
  loop: start=0, step=1, limit=4
  $region2: #{cvae_forward.5} parent=0 // loop_pre_header
    _
  $region3: #{cvae_forward.5} parent=0 // loop_header
    %s9 = sphi 0, %s13
    %p10 = scmp.ge.s32.totalorder %s9, 4
    %s19 = sphi 0, %s21
    %s22 = sphi 0, %s19
    %s23 = sphi 0, %s22
    %s39 = sphi 0, %s23
    %s45 = sphi 0, %s47
    %s48 = sphi 0, %s45
    %s49 = sphi 0, %s48
    %s65 = sphi 0, %s49
    %s71 = sphi 0, %s73
    %s74 = sphi 0, %s71
    %s75 = sphi 0, %s74
    %s91 = sphi 0, %s75
    %s97 = sphi 0, %s99
    %s100 = sphi 0, %s97
    %s101 = sphi 0, %s100
    %s117 = sphi 0, %s101
  $region4: #{cvae_forward.5} parent=0 // loop_header_branch
    %12 = sbr.rel (%p10) target = $region8
  $region5: #{cvae_forward.5} parent=0 // loop_body
    %s14 = ssub.s32 %s9, 1
    %s15 = ssub.s32 %s9, 2
    %s16 = sadd.s32 %s9, 1
    %s17 = ssub.s32 %s9, %s16
    %p18 = scmp.eq.s32.totalorder %s17, 0
    %s20 = sadd.s32 %s19, 1
    %s21 = scalar_select %p18, %s19, %s20
    %p24 = pneg %p18
    %p25 = scmp.eq.s32.totalorder %s9, 1
    %p26 = por %p24, %p25
    %p27 = scmp.ne.s32.totalorder %s19, %s22
    %p28 = scmp.eq.s32.totalorder %s9, 0
    %p29 = por %p27, %p28
    %p30 = scmp.ne.s32.totalorder %s19, %s22
    %p31 = scmp.eq.s32.totalorder %s14, 1
    %p32 = por %p30, %p31
    %p33 = scmp.ne.s32.totalorder %s22, %s23
    %p34 = scmp.eq.s32.totalorder %s14, 0
    %p35 = por %p33, %p34
    %p36 = scmp.ne.s32.totalorder %s22, %s23
    %p37 = scmp.eq.s32.totalorder %s15, 1
    %p38 = por %p36, %p37
    %p40 = scmp.ne.s32.totalorder %s23, %s39
    %p41 = scmp.eq.s32.totalorder %s15, 0
    %p42 = por %p40, %p41
    %s43 = ssub.s32 %s9, %s16
    %p44 = scmp.eq.s32.totalorder %s43, 0
    %s46 = sadd.s32 %s45, 1
    %s47 = scalar_select %p44, %s45, %s46
    %p50 = pneg %p44
    %p51 = scmp.eq.s32.totalorder %s9, 1
    %p52 = por %p50, %p51
    %p53 = scmp.ne.s32.totalorder %s45, %s48
    %p54 = scmp.eq.s32.totalorder %s9, 0
    %p55 = por %p53, %p54
    %p56 = scmp.ne.s32.totalorder %s45, %s48
    %p57 = scmp.eq.s32.totalorder %s14, 1
    %p58 = por %p56, %p57
    %p59 = scmp.ne.s32.totalorder %s48, %s49
    %p60 = scmp.eq.s32.totalorder %s14, 0
    %p61 = por %p59, %p60
    %p62 = scmp.ne.s32.totalorder %s48, %s49
    %p63 = scmp.eq.s32.totalorder %s15, 1
    %p64 = por %p62, %p63
    %p66 = scmp.ne.s32.totalorder %s49, %s65
    %p67 = scmp.eq.s32.totalorder %s15, 0
    %p68 = por %p66, %p67
    %s69 = ssub.s32 %s9, %s16
    %p70 = scmp.eq.s32.totalorder %s69, 0
    %s72 = sadd.s32 %s71, 1
    %s73 = scalar_select %p70, %s71, %s72
    %p76 = pneg %p70
    %p77 = scmp.eq.s32.totalorder %s9, 1
    %p78 = por %p76, %p77
    %p79 = scmp.ne.s32.totalorder %s71, %s74
    %p80 = scmp.eq.s32.totalorder %s9, 0
    %p81 = por %p79, %p80
    %p82 = scmp.ne.s32.totalorder %s71, %s74
    %p83 = scmp.eq.s32.totalorder %s14, 1
    %p84 = por %p82, %p83
    %p85 = scmp.ne.s32.totalorder %s74, %s75
    %p86 = scmp.eq.s32.totalorder %s14, 0
    %p87 = por %p85, %p86
    %p88 = scmp.ne.s32.totalorder %s74, %s75
    %p89 = scmp.eq.s32.totalorder %s15, 1
    %p90 = por %p88, %p89
    %p92 = scmp.ne.s32.totalorder %s75, %s91
    %p93 = scmp.eq.s32.totalorder %s15, 0
    %p94 = por %p92, %p93
    %s95 = ssub.s32 %s9, %s16
    %p96 = scmp.eq.s32.totalorder %s95, 0
    %s98 = sadd.s32 %s97, 1
    %s99 = scalar_select %p96, %s97, %s98
    %p102 = pneg %p96
    %p103 = scmp.eq.s32.totalorder %s9, 1
    %p104 = por %p102, %p103
    %p105 = scmp.ne.s32.totalorder %s97, %s100
    %p106 = scmp.eq.s32.totalorder %s9, 0
    %p107 = por %p105, %p106
    %p108 = scmp.ne.s32.totalorder %s97, %s100
    %p109 = scmp.eq.s32.totalorder %s14, 1
    %p110 = por %p108, %p109
    %p111 = scmp.ne.s32.totalorder %s100, %s101
    %p112 = scmp.eq.s32.totalorder %s14, 0
    %p113 = por %p111, %p112
    %p114 = scmp.ne.s32.totalorder %s100, %s101
    %p115 = scmp.eq.s32.totalorder %s15, 1
    %p116 = por %p114, %p115
    %p118 = scmp.ne.s32.totalorder %s101, %s117
    %p119 = scmp.eq.s32.totalorder %s15, 0
    %p120 = por %p118, %p119
    %p121 = scmp.le.s32.totalorder 1, %s9
    %p122 = scmp.lt.s32.totalorder %s9, 3
    %p123 = pnand %p121, %p122
    %p124 = pneg %p123
    // Predicated region
    $region9: #{cvae_forward.5} parent=5 // pred_check
      _
    $region10: #{cvae_forward.5} parent=5 // pred_check_branch
      %126 = sbr.rel (%p123) target = $region12
    $region11: #{cvae_forward.5} parent=5 // pred_region
      %s127 = ssub.s32 %s9, 1
    $region12: #{cvae_forward.5} parent=5 // pred_fallthru
      _
    %p128 = scmp.lt.s32.totalorder %s9, 2
    // Predicated region
    $region13: #{cvae_forward.5} parent=5 // pred_check
      %p129 = pneg %p128
    $region14: #{cvae_forward.5} parent=5 // pred_check_branch
      %131 = sbr.rel (%p129) target = $region16
    $region15: #{cvae_forward.5} parent=5 // pred_region
      // Predicated region
      $region17: #{cvae_forward.5} parent=15 // pred_check
        %p132 = pneg %p29
      $region18: #{cvae_forward.5} parent=15 // pred_check_branch
        %134 = sbr.rel (%p132) target = $region20
      $region19: #{cvae_forward.5} parent=15 // pred_region
        %p135 = scmp.lt.s32.totalorder %s9, 1
        %s136 = scalar_select %p135, %s9, 1
        %s137 = smul.addr %s136, 4
        %s138 = scalar_lea.vmem %s0, %s137
      $region20: #{cvae_forward.5} parent=15 // pred_fallthru
        _
      // Predicated region
      $region21: #{cvae_forward.5} parent=15 // pred_check
        %p139 = pneg %p55
      $region22: #{cvae_forward.5} parent=15 // pred_check_branch
        %141 = sbr.rel (%p139) target = $region24
      $region23: #{cvae_forward.5} parent=15 // pred_region
        %p142 = scmp.lt.s32.totalorder %s9, 1
        %s143 = scalar_select %p142, %s9, 1
        %s144 = smul.addr %s143, 4
        %s145 = scalar_lea.vmem %s1, %s144
      $region24: #{cvae_forward.5} parent=15 // pred_fallthru
        _
      // Predicated region
      $region25: #{cvae_forward.5} parent=15 // pred_check
        %p146 = pneg %p81
      $region26: #{cvae_forward.5} parent=15 // pred_check_branch
        %148 = sbr.rel (%p146) target = $region28
      $region27: #{cvae_forward.5} parent=15 // pred_region
        %p149 = scmp.lt.s32.totalorder %s9, 1
        %s150 = scalar_select %p149, %s9, 1
        %s151 = smul.addr %s150, 4
        %s152 = scalar_lea.vmem %s2, %s151
      $region28: #{cvae_forward.5} parent=15 // pred_fallthru
        _
    $region16: #{cvae_forward.5} parent=5 // pred_fallthru
      _
    %p153 = scmp.le.s32.totalorder 1, %s9
    %p154 = scmp.lt.s32.totalorder %s9, 3
    %p155 = pnand %p153, %p154
    %p156 = pneg %p155
    // Predicated region
    $region29: #{cvae_forward.5} parent=5 // pred_check
      _
    $region30: #{cvae_forward.5} parent=5 // pred_check_branch
      %158 = sbr.rel (%p155) target = $region32
    $region31: #{cvae_forward.5} parent=5 // pred_region
      %s159 = ssub.s32 %s9, 1
      %p160 = scmp.lt.s32.totalorder %s14, 1
      %s161 = scalar_select %p160, %s14, 1
      %s162 = smul.addr %s161, 4
      %s163 = scalar_lea.vmem %s0, %s162
      %p164 = pneg %p35
      %p165 = pneg %p32
      %p166 = scmp.lt.s32.totalorder %s14, 1
      %s167 = scalar_select %p166, %s14, 1
      %s168 = smul.addr %s167, 4
      %s169 = scalar_lea.vmem %s1, %s168
      %p170 = pneg %p61
      %p171 = pneg %p58
      %p172 = scmp.lt.s32.totalorder %s14, 1
      %s173 = scalar_select %p172, %s14, 1
      %s174 = smul.addr %s173, 4
      %s175 = scalar_lea.vmem %s2, %s174
      %p176 = pneg %p87
      %p177 = pneg %p84
      %p178 = pneg %p113
      %p179 = pneg %p110
      %p180 = scmp.lt.s32.totalorder %s14, 1
      %s181 = scalar_select %p180, %s14, 1
      %s182 = scalar_lea.vmem %s3, %s181
      %p183 = scmp.lt.s32.totalorder %s14, 1
      %s184 = scalar_select %p183, %s14, 1
      %s185 = smul.addr %s184, 4
      %s186 = scalar_lea.vmem %s0, %s185
      %p187 = scmp.lt.s32.totalorder %s14, 1
      %s188 = scalar_select %p187, %s14, 1
      %s189 = smul.addr %s188, 4
      %s190 = scalar_lea.vmem %s1, %s189
      %p191 = scmp.lt.s32.totalorder %s14, 1
      %s192 = scalar_select %p191, %s14, 1
      %s193 = smul.addr %s192, 4
      %s194 = scalar_lea.vmem %s2, %s193
      %p195 = scmp.lt.s32.totalorder %s14, 1
      %s196 = scalar_select %p195, %s14, 1
      %s197 = scalar_lea.vmem %s3, %s196
      %v199 = vld [vmem:[%s186] sm:$0xf]
      %v200 = vld [vmem:[%s190] sm:$0xf]
      %v201 = vld [vmem:[%s194] sm:$0xf]
      %202 = vmatprep.subr.bf16.mxu0 0
      %203 = vmatpush1.bf16.xpose.msra.mxu0 %v200
      %204 = vmatprep.subr.bf16.mxu0 0
      %205 = vmatpush1.bf16.xpose.msra.mxu0 0
      %206 = vmatprep.subr.bf16.mxu0 0
      %207 = vmatpush1.bf16.xpose.msra.mxu0 0
      %208 = vmatprep.subr.bf16.mxu0 0
      %209 = vmatpush1.bf16.xpose.msra.mxu0 0
      %210 = vmatprep.subr.bf16.mxu0 0
      %211 = vmatpush1.bf16.xpose.msra.mxu0 0
      %212 = vmatprep.subr.bf16.mxu0 0
      %213 = vmatpush1.bf16.xpose.msra.mxu0 0
      %214 = vmatprep.subr.bf16.mxu0 0
      %215 = vmatpush1.bf16.xpose.msra.mxu0 0
      %216 = vmatprep.subr.bf16.mxu0 0
      %217 = vmatpush1.bf16.xpose.msra.mxu0 0
      %218 = vmatprep.subr.bf16.mxu0 0
      %219 = vmatpush1.bf16.xpose.msra.mxu0 0
      %220 = vmatprep.subr.bf16.mxu0 0
      %221 = vmatpush1.bf16.xpose.msra.mxu0 0
      %222 = vmatprep.subr.bf16.mxu0 0
      %223 = vmatpush1.bf16.xpose.msra.mxu0 0
      %224 = vmatprep.subr.bf16.mxu0 0
      %225 = vmatpush1.bf16.xpose.msra.mxu0 0
      %226 = vmatprep.subr.bf16.mxu0 0
      %227 = vmatpush1.bf16.xpose.msra.mxu0 0
      %228 = vmatprep.subr.bf16.mxu0 0
      %229 = vmatpush1.bf16.xpose.msra.mxu0 0
      %230 = vmatprep.subr.bf16.mxu0 0
      %231 = vmatpush1.bf16.xpose.msra.mxu0 0
      %232 = vmatprep.subr.bf16.mxu0 0
      %233 = vmatpush1.bf16.xpose.msra.mxu0 0
      %234 = vmatprep.mubr.bf16.mxu0 0
      %235 = vmatmul.mubr.bf16.gmra.mrb[0].mxu0 %v199
      %v236 = vpop.f32.mrb[0].mxu0
      %v237 = vadd.f32 0.0, %v236
      %v238 = vpop.f32.mrb[0].mxu0
      %v239 = vpop.f32.mrb[0].mxu0
      %v240 = vpop.f32.mrb[0].mxu0
      %241 = vdwg.mxu0
      %v242 = vmul.f32 %v237, 0.088388346
      %vm243 = vcmask 64512
      %v244 = vsel %vm243, %v242, -inf
      %245 = vmax.xlane.f32.xlu0 %v244
      %v246 = vpop.xlane.xlu0 %245
      %v247 = vsub.f32 %v242, %v246
      %v248 = vmul.f32 %v247, 1.442695
      %v249 = vpow.pop %v248
      %v250 = vsel %vm243, %v249, 0.0
      %251 = vadd.xlane.f32.xlu0 %v250
      %v252 = vpop.xlane.xlu0 %251
      %v253 = vrcp.pop %v252
      %v254 = vmul.f32 %v249, %v253
      %v255 = vpack.c.bf16 %v254, %v254
      %v257 = vsel %vm243, %v255, 0
      %vm259 = vcmask 1043456
      %v261 = vsel %vm259, %v201, 0
      %263 = vmatprep.subr.bf16.mxu0 0
      %264 = vmatpush1.bf16.msra.mxu0 %v261
      %265 = vmatprep.subr.bf16.mxu0 0
      %266 = vmatpush1.bf16.msra.mxu0 0
      %267 = vmatprep.subr.bf16.mxu0 0
      %268 = vmatpush1.bf16.msra.mxu0 0
      %269 = vmatprep.subr.bf16.mxu0 0
      %270 = vmatpush1.bf16.msra.mxu0 0
      %271 = vmatprep.subr.bf16.mxu0 0
      %272 = vmatpush1.bf16.msra.mxu0 0
      %273 = vmatprep.subr.bf16.mxu0 0
      %274 = vmatpush1.bf16.msra.mxu0 0
      %275 = vmatprep.subr.bf16.mxu0 0
      %276 = vmatpush1.bf16.msra.mxu0 0
      %277 = vmatprep.subr.bf16.mxu0 0
      %278 = vmatpush1.bf16.msra.mxu0 0
      %279 = vmatprep.subr.bf16.mxu0 0
      %280 = vmatpush1.bf16.msra.mxu0 0
      %281 = vmatprep.subr.bf16.mxu0 0
      %282 = vmatpush1.bf16.msra.mxu0 0
      %283 = vmatprep.subr.bf16.mxu0 0
      %284 = vmatpush1.bf16.msra.mxu0 0
      %285 = vmatprep.subr.bf16.mxu0 0
      %286 = vmatpush1.bf16.msra.mxu0 0
      %287 = vmatprep.subr.bf16.mxu0 0
      %288 = vmatpush1.bf16.msra.mxu0 0
      %289 = vmatprep.subr.bf16.mxu0 0
      %290 = vmatpush1.bf16.msra.mxu0 0
      %291 = vmatprep.subr.bf16.mxu0 0
      %292 = vmatpush1.bf16.msra.mxu0 0
      %293 = vmatprep.subr.bf16.mxu0 0
      %294 = vmatpush1.bf16.msra.mxu0 0
      %295 = vmatprep.mubr.bf16.mxu0 0
      %296 = vmatmul.mubr.bf16.gmra.mrb[0].mxu0 %v257
      %v297 = vpop.f32.mrb[0].mxu0
      %v298 = vadd.f32 0.0, %v297
      %v299 = vpop.f32.mrb[0].mxu0
      %v300 = vpop.f32.mrb[0].mxu0
      %v301 = vpop.f32.mrb[0].mxu0
      %302 = vdwg.mxu0
      %v303 = vrot.slane %v298, 4
      %v304 = vadd.f32 %v298, %v303
      %v305 = vrot.slane %v304, 2
      %v306 = vadd.f32 %v304, %v305
      %v307 = vrot.slane %v306, 1
      %v308 = vadd.f32 %v306, %v307
      %v309 = vmul.f32 %v308, 0.125
      %310 = vst [vmem:[%s197] sm:$0x1] %v309
      %p311 = scmp.lt.s32.totalorder %s14, 1
      %s312 = scalar_select %p311, %s14, 1
      %s313 = scalar_lea.vmem %s3, %s312
      // Predicated region
      $region33: #{cvae_forward.5} parent=31 // pred_check
        %p314 = pneg %p110
      $region34: #{cvae_forward.5} parent=31 // pred_check_branch
        %316 = sbr.rel (%p314) target = $region36
      $region35: #{cvae_forward.5} parent=31 // pred_region
        _
      $region36: #{cvae_forward.5} parent=31 // pred_fallthru
        _
    $region32: #{cvae_forward.5} parent=5 // pred_fallthru
      _
    %p317 = scmp.le.s32.totalorder 2, %s9
    // Predicated region
    $region37: #{cvae_forward.5} parent=5 // pred_check
      %p318 = pneg %p317
    $region38: #{cvae_forward.5} parent=5 // pred_check_branch
      %320 = sbr.rel (%p318) target = $region40
    $region39: #{cvae_forward.5} parent=5 // pred_region
      %s321 = ssub.s32 %s9, 2
      // Predicated region
      $region41: #{cvae_forward.5} parent=39 // pred_check
        %p322 = pneg %p116
      $region42: #{cvae_forward.5} parent=39 // pred_check_branch
        %324 = sbr.rel (%p322) target = $region44
      $region43: #{cvae_forward.5} parent=39 // pred_region
        %p325 = scmp.lt.s32.totalorder %s15, 1
        %s326 = scalar_select %p325, %s15, 1
        %s327 = scalar_lea.vmem %s3, %s326
      $region44: #{cvae_forward.5} parent=39 // pred_fallthru
        _
    $region40: #{cvae_forward.5} parent=5 // pred_fallthru
      _
  $region6: #{cvae_forward.5} parent=0 // loop_footer
    %s13 = sadd.s32 1, %s9
  $region7: #{cvae_forward.5} parent=0 // loop_footer_branch
    %8 = sbr.rel target = $region3
  $region8: #{cvae_forward.5} parent=0 // loop_exit
    _

// kernel: cvae_forward.4
$region0: #{cvae_forward.4}
  #allocation0 [shape = 'u32[]', space=smem, size = 0x4, offset = 0x4, fixed_abs, tag = 'smem constant byte address 0x4 - core index']
  #allocation1 [shape = 'u32[144,128]{1,0:T(1,128)}', space=vmem, size = 0x12000, scoped, tag = 'internal scratch']
  %s0 = inlined_call_operand.vmem [shape: bf16[2,2,8,128], index: 0, kind: input, shape index: {}]
  %s1 = inlined_call_operand.vmem [shape: bf16[2,128,128], index: 1, kind: input, shape index: {}]
  %s2 = inlined_call_operand.vmem [shape: f32[2,1,128], index: 2, kind: input, shape index: {}]
  %s3 = inlined_call_operand.vmem [shape: bf16[2,2,8,128], index: 3, kind: output, shape index: {0}]
  %s4 = inlined_call_operand.vmem [shape: f32[2,2,1,128], index: 4, kind: output, shape index: {1}]
  %5 = xla_tuple %s3, %s4
  %s6 = sld [smem:[#allocation0]]
  $region57: #{cvae_forward.4} parent=0
    _
  %s8 = ssub.s32 1, %s6
  %s9 = scalar_select 0, %s8, %s6
  loop: start=0, step=1, limit=6
  $region2: #{cvae_forward.4} parent=0 // loop_pre_header
    _
  $region3: #{cvae_forward.4} parent=0 // loop_header
    %s11 = sphi 0, %s15
    %p12 = scmp.ge.s32.totalorder %s11, 6
    %s18 = sphi 0, %s37
    %s19 = sphi 0, %s33
    %s20 = sphi 0, %s29
    %s21 = sphi 0, %s18
    %s22 = sphi 0, %s19
    %s23 = sphi 0, %s20
    %s24 = sphi 0, %s21
    %s25 = sphi 0, %s22
    %s26 = sphi 0, %s23
    %s44 = sphi 0, %s46
    %s47 = sphi 0, %s44
    %s48 = sphi 0, %s47
    %s64 = sphi 0, %s48
    %s70 = sphi 0, %s72
    %s73 = sphi 0, %s70
    %s74 = sphi 0, %s73
    %s90 = sphi 0, %s74
    %s96 = sphi 0, %s98
    %s99 = sphi 0, %s96
    %s100 = sphi 0, %s99
    %s116 = sphi 0, %s100
    %s126 = sphi 0, %s128
    %s129 = sphi 0, %s126
    %s130 = sphi 0, %s129
    %s146 = sphi 0, %s130
    %s154 = sphi 0, %s156
    %s157 = sphi 0, %s154
    %s158 = sphi 0, %s157
    %s174 = sphi 0, %s158
  $region4: #{cvae_forward.4} parent=0 // loop_header_branch
    %14 = sbr.rel (%p12) target = $region8
  $region5: #{cvae_forward.4} parent=0 // loop_body
    %s16 = ssub.s32 %s11, 1
    %s17 = ssub.s32 %s11, 2
    %s27 = sadd.s32 1, %s20
    %p28 = scmp.ge.s32.totalorder %s27, 1
    %s29 = scalar_select %p28, 0, %s27
    %s30 = sadd.s32 1, %s19
    %s31 = scalar_select %p28, %s30, %s19
    %p32 = scmp.ge.s32.totalorder %s31, 2
    %s33 = scalar_select %p32, 0, %s31
    %s34 = sadd.s32 1, %s18
    %s35 = scalar_select %p32, %s34, %s18
    %p36 = scmp.ge.s32.totalorder %s35, 2
    %s37 = scalar_select %p36, 0, %s35
    %s38 = ssub.s32 %s18, %s37
    %s39 = ssub.s32 %s19, %s33
    %s40 = sor.u32 %s38, %s39
    %s41 = ssub.s32 %s20, %s29
    %s42 = sor.u32 %s40, %s41
    %p43 = scmp.eq.s32.totalorder %s42, 0
    %s45 = sadd.s32 %s44, 1
    %s46 = scalar_select %p43, %s44, %s45
    %p49 = pneg %p43
    %p50 = scmp.eq.s32.totalorder %s11, 3
    %p51 = por %p49, %p50
    %p52 = scmp.ne.s32.totalorder %s44, %s47
    %p53 = scmp.eq.s32.totalorder %s11, 0
    %p54 = por %p52, %p53
    %p55 = scmp.ne.s32.totalorder %s44, %s47
    %p56 = scmp.eq.s32.totalorder %s16, 3
    %p57 = por %p55, %p56
    %p58 = scmp.ne.s32.totalorder %s47, %s48
    %p59 = scmp.eq.s32.totalorder %s16, 0
    %p60 = por %p58, %p59
    %p61 = scmp.ne.s32.totalorder %s47, %s48
    %p62 = scmp.eq.s32.totalorder %s17, 3
    %p63 = por %p61, %p62
    %p65 = scmp.ne.s32.totalorder %s48, %s64
    %p66 = scmp.eq.s32.totalorder %s17, 0
    %p67 = por %p65, %p66
    %s68 = ssub.s32 %s18, %s37
    %p69 = scmp.eq.s32.totalorder %s68, 0
    %s71 = sadd.s32 %s70, 1
    %s72 = scalar_select %p69, %s70, %s71
    %p75 = pneg %p69
    %p76 = scmp.eq.s32.totalorder %s11, 3
    %p77 = por %p75, %p76
    %p78 = scmp.ne.s32.totalorder %s70, %s73
    %p79 = scmp.eq.s32.totalorder %s11, 0
    %p80 = por %p78, %p79
    %p81 = scmp.ne.s32.totalorder %s70, %s73
    %p82 = scmp.eq.s32.totalorder %s16, 3
    %p83 = por %p81, %p82
    %p84 = scmp.ne.s32.totalorder %s73, %s74
    %p85 = scmp.eq.s32.totalorder %s16, 0
    %p86 = por %p84, %p85
    %p87 = scmp.ne.s32.totalorder %s73, %s74
    %p88 = scmp.eq.s32.totalorder %s17, 3
    %p89 = por %p87, %p88
    %p91 = scmp.ne.s32.totalorder %s74, %s90
    %p92 = scmp.eq.s32.totalorder %s17, 0
    %p93 = por %p91, %p92
    %s94 = ssub.s32 %s18, %s37
    %p95 = scmp.eq.s32.totalorder %s94, 0
    %s97 = sadd.s32 %s96, 1
    %s98 = scalar_select %p95, %s96, %s97
    %p101 = pneg %p95
    %p102 = scmp.eq.s32.totalorder %s11, 3
    %p103 = por %p101, %p102
    %p104 = scmp.ne.s32.totalorder %s96, %s99
    %p105 = scmp.eq.s32.totalorder %s11, 0
    %p106 = por %p104, %p105
    %p107 = scmp.ne.s32.totalorder %s96, %s99
    %p108 = scmp.eq.s32.totalorder %s16, 3
    %p109 = por %p107, %p108
    %p110 = scmp.ne.s32.totalorder %s99, %s100
    %p111 = scmp.eq.s32.totalorder %s16, 0
    %p112 = por %p110, %p111
    %p113 = scmp.ne.s32.totalorder %s99, %s100
    %p114 = scmp.eq.s32.totalorder %s17, 3
    %p115 = por %p113, %p114
    %p117 = scmp.ne.s32.totalorder %s100, %s116
    %p118 = scmp.eq.s32.totalorder %s17, 0
    %p119 = por %p117, %p118
    %s120 = ssub.s32 %s18, %s37
    %s121 = ssub.s32 %s19, %s33
    %s122 = sor.u32 %s120, %s121
    %s123 = ssub.s32 %s20, %s29
    %s124 = sor.u32 %s122, %s123
    %p125 = scmp.eq.s32.totalorder %s124, 0
    %s127 = sadd.s32 %s126, 1
    %s128 = scalar_select %p125, %s126, %s127
    %p131 = pneg %p125
    %p132 = scmp.eq.s32.totalorder %s11, 3
    %p133 = por %p131, %p132
    %p134 = scmp.ne.s32.totalorder %s126, %s129
    %p135 = scmp.eq.s32.totalorder %s11, 0
    %p136 = por %p134, %p135
    %p137 = scmp.ne.s32.totalorder %s126, %s129
    %p138 = scmp.eq.s32.totalorder %s16, 3
    %p139 = por %p137, %p138
    %p140 = scmp.ne.s32.totalorder %s129, %s130
    %p141 = scmp.eq.s32.totalorder %s16, 0
    %p142 = por %p140, %p141
    %p143 = scmp.ne.s32.totalorder %s129, %s130
    %p144 = scmp.eq.s32.totalorder %s17, 3
    %p145 = por %p143, %p144
    %p147 = scmp.ne.s32.totalorder %s130, %s146
    %p148 = scmp.eq.s32.totalorder %s17, 0
    %p149 = por %p147, %p148
    %s150 = ssub.s32 %s18, %s37
    %s151 = ssub.s32 %s19, %s33
    %s152 = sor.u32 %s150, %s151
    %p153 = scmp.eq.s32.totalorder %s152, 0
    %s155 = sadd.s32 %s154, 1
    %s156 = scalar_select %p153, %s154, %s155
    %p159 = pneg %p153
    %p160 = scmp.eq.s32.totalorder %s11, 3
    %p161 = por %p159, %p160
    %p162 = scmp.ne.s32.totalorder %s154, %s157
    %p163 = scmp.eq.s32.totalorder %s11, 0
    %p164 = por %p162, %p163
    %p165 = scmp.ne.s32.totalorder %s154, %s157
    %p166 = scmp.eq.s32.totalorder %s16, 3
    %p167 = por %p165, %p166
    %p168 = scmp.ne.s32.totalorder %s157, %s158
    %p169 = scmp.eq.s32.totalorder %s16, 0
    %p170 = por %p168, %p169
    %p171 = scmp.ne.s32.totalorder %s157, %s158
    %p172 = scmp.eq.s32.totalorder %s17, 3
    %p173 = por %p171, %p172
    %p175 = scmp.ne.s32.totalorder %s158, %s174
    %p176 = scmp.eq.s32.totalorder %s17, 0
    %p177 = por %p175, %p176
    %p178 = scmp.le.s32.totalorder 1, %s11
    %p179 = scmp.lt.s32.totalorder %s11, 5
    %p180 = pnand %p178, %p179
    %p181 = pneg %p180
    // Predicated region
    $region9: #{cvae_forward.4} parent=5 // pred_check
      _
    $region10: #{cvae_forward.4} parent=5 // pred_check_branch
      %183 = sbr.rel (%p180) target = $region12
    $region11: #{cvae_forward.4} parent=5 // pred_region
      %s184 = ssub.s32 %s11, 1
    $region12: #{cvae_forward.4} parent=5 // pred_fallthru
      _
    %p185 = scmp.lt.s32.totalorder %s11, 4
    // Predicated region
    $region13: #{cvae_forward.4} parent=5 // pred_check
      %p186 = pneg %p185
    $region14: #{cvae_forward.4} parent=5 // pred_check_branch
      %188 = sbr.rel (%p186) target = $region16
    $region15: #{cvae_forward.4} parent=5 // pred_region
      // Predicated region
      $region17: #{cvae_forward.4} parent=15 // pred_check
        %p189 = pneg %p54
      $region18: #{cvae_forward.4} parent=15 // pred_check_branch
        %191 = sbr.rel (%p189) target = $region20
      $region19: #{cvae_forward.4} parent=15 // pred_region
        %p192 = scmp.lt.s32.totalorder %s18, 1
        %s193 = scalar_select %p192, %s18, 1
        %p194 = scmp.lt.s32.totalorder %s19, 1
        %s195 = scalar_select %p194, %s19, 1
        %p196 = scmp.lt.s32.totalorder %s20, 0
        %s197 = scalar_select %p196, %s20, 0
        %s198 = sadd.s32 %s197, %s195
        %s199 = smul.addr %s193, 2
        %s200 = sadd.s32 %s198, %s199
        %s201 = smul.addr %s200, 4
        %s202 = scalar_lea.vmem %s0, %s201
      $region20: #{cvae_forward.4} parent=15 // pred_fallthru
        _
      // Predicated region
      $region21: #{cvae_forward.4} parent=15 // pred_check
        %p203 = pneg %p80
      $region22: #{cvae_forward.4} parent=15 // pred_check_branch
        %205 = sbr.rel (%p203) target = $region24
      $region23: #{cvae_forward.4} parent=15 // pred_region
        %p206 = scmp.lt.s32.totalorder %s18, 1
        %s207 = scalar_select %p206, %s18, 1
        %s208 = smul.addr %s207, 16
        %s209 = smul.addr %s208, 4
        %s210 = scalar_lea.vmem %s1, %s209
      $region24: #{cvae_forward.4} parent=15 // pred_fallthru
        _
      // Predicated region
      $region25: #{cvae_forward.4} parent=15 // pred_check
        %p211 = pneg %p106
      $region26: #{cvae_forward.4} parent=15 // pred_check_branch
        %213 = sbr.rel (%p211) target = $region28
      $region27: #{cvae_forward.4} parent=15 // pred_region
        %p214 = scmp.lt.s32.totalorder %s18, 1
        %s215 = scalar_select %p214, %s18, 1
        %s216 = scalar_lea.vmem %s2, %s215
      $region28: #{cvae_forward.4} parent=15 // pred_fallthru
        _
    $region16: #{cvae_forward.4} parent=5 // pred_fallthru
      _
    %p217 = scmp.le.s32.totalorder 1, %s11
    %p218 = scmp.lt.s32.totalorder %s11, 5
    %p219 = pnand %p217, %p218
    %p220 = pneg %p219
    // Predicated region
    $region29: #{cvae_forward.4} parent=5 // pred_check
      _
    $region30: #{cvae_forward.4} parent=5 // pred_check_branch
      %222 = sbr.rel (%p219) target = $region32
    $region31: #{cvae_forward.4} parent=5 // pred_region
      %s223 = ssub.s32 %s11, 1
      %p224 = scmp.lt.s32.totalorder %s21, 1
      %s225 = scalar_select %p224, %s21, 1
      %p226 = scmp.lt.s32.totalorder %s22, 1
      %s227 = scalar_select %p226, %s22, 1
      %p228 = scmp.lt.s32.totalorder %s23, 0
      %s229 = scalar_select %p228, %s23, 0
      %s230 = sadd.s32 %s229, %s227
      %s231 = smul.addr %s225, 2
      %s232 = sadd.s32 %s230, %s231
      %s233 = smul.addr %s232, 4
      %s234 = scalar_lea.vmem %s0, %s233
      %p235 = pneg %p60
      %p236 = pneg %p57
      %p237 = scmp.lt.s32.totalorder %s21, 1
      %s238 = scalar_select %p237, %s21, 1
      %s239 = smul.addr %s238, 16
      %s240 = smul.addr %s239, 4
      %s241 = scalar_lea.vmem %s1, %s240
      %p242 = pneg %p86
      %p243 = pneg %p83
      %p244 = scmp.lt.s32.totalorder %s21, 1
      %s245 = scalar_select %p244, %s21, 1
      %s246 = scalar_lea.vmem %s2, %s245
      %p247 = pneg %p112
      %p248 = pneg %p109
      %p249 = pneg %p142
      %p250 = pneg %p139
      %p251 = scmp.lt.s32.totalorder %s21, 1
      %s252 = scalar_select %p251, %s21, 1
      %p253 = scmp.lt.s32.totalorder %s22, 1
      %s254 = scalar_select %p253, %s22, 1
      %p255 = scmp.lt.s32.totalorder %s23, 0
      %s256 = scalar_select %p255, %s23, 0
      %s257 = sadd.s32 %s256, %s254
      %s258 = smul.addr %s252, 2
      %s259 = sadd.s32 %s257, %s258
      %s260 = smul.addr %s259, 4
      %s261 = scalar_lea.vmem %s3, %s260
      %p262 = pneg %p170
      %p263 = pneg %p167
      %p264 = scmp.lt.s32.totalorder %s21, 1
      %s265 = scalar_select %p264, %s21, 1
      %p266 = scmp.lt.s32.totalorder %s22, 1
      %s267 = scalar_select %p266, %s22, 1
      %s268 = smul.addr %s265, 2
      %s269 = sadd.s32 %s267, %s268
      %s270 = scalar_lea.vmem %s4, %s269
      %p271 = scmp.lt.s32.totalorder %s21, 1
      %s272 = scalar_select %p271, %s21, 1
      %p273 = scmp.lt.s32.totalorder %s22, 1
      %s274 = scalar_select %p273, %s22, 1
      %p275 = scmp.lt.s32.totalorder %s23, 0
      %s276 = scalar_select %p275, %s23, 0
      %s277 = sadd.s32 %s276, %s274
      %s278 = smul.addr %s272, 2
      %s279 = sadd.s32 %s277, %s278
      %s280 = smul.addr %s279, 4
      %s281 = scalar_lea.vmem %s0, %s280
      %p282 = scmp.lt.s32.totalorder %s21, 1
      %s283 = scalar_select %p282, %s21, 1
      %s284 = smul.addr %s283, 16
      %s285 = smul.addr %s284, 4
      %s286 = scalar_lea.vmem %s1, %s285
      %p287 = scmp.lt.s32.totalorder %s21, 1
      %s288 = scalar_select %p287, %s21, 1
      %s289 = scalar_lea.vmem %s2, %s288
      %p290 = scmp.lt.s32.totalorder %s21, 1
      %s291 = scalar_select %p290, %s21, 1
      %p292 = scmp.lt.s32.totalorder %s22, 1
      %s293 = scalar_select %p292, %s22, 1
      %p294 = scmp.lt.s32.totalorder %s23, 0
      %s295 = scalar_select %p294, %s23, 0
      %s296 = sadd.s32 %s295, %s293
      %s297 = smul.addr %s291, 2
      %s298 = sadd.s32 %s296, %s297
      %s299 = smul.addr %s298, 4
      %s300 = scalar_lea.vmem %s3, %s299
      %p301 = scmp.lt.s32.totalorder %s21, 1
      %s302 = scalar_select %p301, %s21, 1
      %p303 = scmp.lt.s32.totalorder %s22, 1
      %s304 = scalar_select %p303, %s22, 1
      %s305 = smul.addr %s302, 2
      %s306 = sadd.s32 %s304, %s305
      %s307 = scalar_lea.vmem %s4, %s306
      %p309 = scmp.eq.s32.totalorder %s23, 0
      // Predicated region
      $region33: #{cvae_forward.4} parent=31 // pred_check
        %p310 = pneg %p309
      $region34: #{cvae_forward.4} parent=31 // pred_check_branch
        %312 = sbr.rel (%p310) target = $region36
      $region35: #{cvae_forward.4} parent=31 // pred_region
        %313 = vst [vmem:[%s307] sm:$0x1] 0.0
      $region36: #{cvae_forward.4} parent=31 // pred_fallthru
        _
      %v314 = vld [vmem:[%s281] sm:$0xf]
      %v315 = vld [vmem:[%s286] sm:$0xf]
      %v316 = vld [vmem:[%s286 + $0x4] sm:$0xf]
      %v317 = vld [vmem:[%s286 + $0x8] sm:$0xf]
      %v318 = vld [vmem:[%s286 + $0xc] sm:$0xf]
      %v319 = vld [vmem:[%s286 + $0x10] sm:$0xf]
      %v320 = vld [vmem:[%s286 + $0x14] sm:$0xf]
      %v321 = vld [vmem:[%s286 + $0x18] sm:$0xf]
      %v322 = vld [vmem:[%s286 + $0x1c] sm:$0xf]
      %v323 = vld [vmem:[%s286 + $0x20] sm:$0xf]
      %v324 = vld [vmem:[%s286 + $0x24] sm:$0xf]
      %v325 = vld [vmem:[%s286 + $0x28] sm:$0xf]
      %v326 = vld [vmem:[%s286 + $0x2c] sm:$0xf]
      %v327 = vld [vmem:[%s286 + $0x30] sm:$0xf]
      %v328 = vld [vmem:[%s286 + $0x34] sm:$0xf]
      %v329 = vld [vmem:[%s286 + $0x38] sm:$0xf]
      %v330 = vld [vmem:[%s286 + $0x3c] sm:$0xf]
      %v331 = vld [vmem:[%s289] sm:$0x1]
      %v333 = vlaneseq
      %v334 = vshrl.u32 %v333, 7
      %v335 = vsub.s32 0, %v334
      %v336 = vrot.slane %v331, %v335
      %v354 = vunpack.c.l.b16 %v315
      %v355 = vunpack.c.l.b16 %v316
      %v356 = vunpack.c.l.b16 %v317
      %v357 = vunpack.c.l.b16 %v318
      %v358 = vunpack.c.l.b16 %v319
      %v359 = vunpack.c.l.b16 %v320
      %v360 = vunpack.c.l.b16 %v321
      %v361 = vunpack.c.l.b16 %v322
      %v362 = vunpack.c.l.b16 %v323
      %v363 = vunpack.c.l.b16 %v324
      %v364 = vunpack.c.l.b16 %v325
      %v365 = vunpack.c.l.b16 %v326
      %v366 = vunpack.c.l.b16 %v327
      %v367 = vunpack.c.l.b16 %v328
      %v368 = vunpack.c.l.b16 %v329
      %v369 = vunpack.c.l.b16 %v330
      %v370 = vpack.c.b16 %v355, %v354
      %v371 = vpack.c.b16 %v357, %v356
      %v372 = vpack.c.b16 %v359, %v358
      %v373 = vpack.c.b16 %v361, %v360
      %v374 = vpack.c.b16 %v363, %v362
      %v375 = vpack.c.b16 %v365, %v364
      %v376 = vpack.c.b16 %v367, %v366
      %v377 = vpack.c.b16 %v369, %v368
      %386 = vmatprep.subr.bf16.mxu0 0
      %387 = vmatpush1.bf16.msra.mxu0 %v370
      %388 = vmatprep.subr.bf16.mxu0 0
      %389 = vmatpush1.bf16.msra.mxu0 %v371
      %390 = vmatprep.subr.bf16.mxu0 0
      %391 = vmatpush1.bf16.msra.mxu0 %v372
      %392 = vmatprep.subr.bf16.mxu0 0
      %393 = vmatpush1.bf16.msra.mxu0 %v373
      %394 = vmatprep.subr.bf16.mxu0 0
      %395 = vmatpush1.bf16.msra.mxu0 %v374
      %396 = vmatprep.subr.bf16.mxu0 0
      %397 = vmatpush1.bf16.msra.mxu0 %v375
      %398 = vmatprep.subr.bf16.mxu0 0
      %399 = vmatpush1.bf16.msra.mxu0 %v376
      %400 = vmatprep.subr.bf16.mxu0 0
      %401 = vmatpush1.bf16.msra.mxu0 %v377
      %402 = vmatprep.subr.bf16.mxu0 0
      %403 = vmatpush1.bf16.msra.mxu0 0
      %404 = vmatprep.subr.bf16.mxu0 0
      %405 = vmatpush1.bf16.msra.mxu0 0
      %406 = vmatprep.subr.bf16.mxu0 0
      %407 = vmatpush1.bf16.msra.mxu0 0
      %408 = vmatprep.subr.bf16.mxu0 0
      %409 = vmatpush1.bf16.msra.mxu0 0
      %410 = vmatprep.subr.bf16.mxu0 0
      %411 = vmatpush1.bf16.msra.mxu0 0
      %412 = vmatprep.subr.bf16.mxu0 0
      %413 = vmatpush1.bf16.msra.mxu0 0
      %414 = vmatprep.subr.bf16.mxu0 0
      %415 = vmatpush1.bf16.msra.mxu0 0
      %416 = vmatprep.subr.bf16.mxu0 0
      %417 = vmatpush1.bf16.msra.mxu0 0
      %418 = vmatprep.mubr.bf16.mxu0 0
      %419 = vmatmul.mubr.bf16.gmra.mrb[0].mxu0 %v314
      %v420 = vpop.f32.mrb[0].mxu0
      %v421 = vadd.f32 %v336, %v420
      %v422 = vpop.f32.mrb[0].mxu0
      %v423 = vpop.f32.mrb[0].mxu0
      %v424 = vpop.f32.mrb[0].mxu0
      %425 = vdwg.mxu0
      %v426 = vtanh.pop %v421
      %v427 = vpack.c.bf16 %v426, %v426
      %428 = vst [vmem:[%s300] sm:$0xf] %v427
      %v429 = vld [vmem:[%s307] sm:$0x1]
      %v430 = vrot.slane %v426, 4
      %v431 = vadd.f32 %v426, %v430
      %v432 = vrot.slane %v431, 2
      %v433 = vadd.f32 %v431, %v432
      %v434 = vrot.slane %v433, 1
      %v435 = vadd.f32 %v433, %v434
      %v436 = vmul.f32 %v435, 0.125
      %v437 = vadd.f32 %v429, %v436
      %438 = vst [vmem:[%s307] sm:$0x1] %v437
      %p439 = scmp.lt.s32.totalorder %s21, 1
      %s440 = scalar_select %p439, %s21, 1
      %p441 = scmp.lt.s32.totalorder %s22, 1
      %s442 = scalar_select %p441, %s22, 1
      %p443 = scmp.lt.s32.totalorder %s23, 0
      %s444 = scalar_select %p443, %s23, 0
      %s445 = sadd.s32 %s444, %s442
      %s446 = smul.addr %s440, 2
      %s447 = sadd.s32 %s445, %s446
      %s448 = smul.addr %s447, 4
      %s449 = scalar_lea.vmem %s3, %s448
      %p450 = scmp.lt.s32.totalorder %s21, 1
      %s451 = scalar_select %p450, %s21, 1
      %p452 = scmp.lt.s32.totalorder %s22, 1
      %s453 = scalar_select %p452, %s22, 1
      %s454 = smul.addr %s451, 2
      %s455 = sadd.s32 %s453, %s454
      %s456 = scalar_lea.vmem %s4, %s455
      // Predicated region
      $region37: #{cvae_forward.4} parent=31 // pred_check
        %p457 = pneg %p139
      $region38: #{cvae_forward.4} parent=31 // pred_check_branch
        %459 = sbr.rel (%p457) target = $region40
      $region39: #{cvae_forward.4} parent=31 // pred_region
        _
      $region40: #{cvae_forward.4} parent=31 // pred_fallthru
        _
      // Predicated region
      $region41: #{cvae_forward.4} parent=31 // pred_check
        %p460 = pneg %p167
      $region42: #{cvae_forward.4} parent=31 // pred_check_branch
        %462 = sbr.rel (%p460) target = $region44
      $region43: #{cvae_forward.4} parent=31 // pred_region
        _
      $region44: #{cvae_forward.4} parent=31 // pred_fallthru
        _
    $region32: #{cvae_forward.4} parent=5 // pred_fallthru
      _
    %p463 = scmp.le.s32.totalorder 2, %s11
    // Predicated region
    $region45: #{cvae_forward.4} parent=5 // pred_check
      %p464 = pneg %p463
    $region46: #{cvae_forward.4} parent=5 // pred_check_branch
      %466 = sbr.rel (%p464) target = $region48
    $region47: #{cvae_forward.4} parent=5 // pred_region
      %s467 = ssub.s32 %s11, 2
      // Predicated region
      $region49: #{cvae_forward.4} parent=47 // pred_check
        %p468 = pneg %p145
      $region50: #{cvae_forward.4} parent=47 // pred_check_branch
        %470 = sbr.rel (%p468) target = $region52
      $region51: #{cvae_forward.4} parent=47 // pred_region
        %p471 = scmp.lt.s32.totalorder %s24, 1
        %s472 = scalar_select %p471, %s24, 1
        %p473 = scmp.lt.s32.totalorder %s25, 1
        %s474 = scalar_select %p473, %s25, 1
        %p475 = scmp.lt.s32.totalorder %s26, 0
        %s476 = scalar_select %p475, %s26, 0
        %s477 = sadd.s32 %s476, %s474
        %s478 = smul.addr %s472, 2
        %s479 = sadd.s32 %s477, %s478
        %s480 = smul.addr %s479, 4
        %s481 = scalar_lea.vmem %s3, %s480
      $region52: #{cvae_forward.4} parent=47 // pred_fallthru
        _
      // Predicated region
      $region53: #{cvae_forward.4} parent=47 // pred_check
        %p482 = pneg %p173
      $region54: #{cvae_forward.4} parent=47 // pred_check_branch
        %484 = sbr.rel (%p482) target = $region56
      $region55: #{cvae_forward.4} parent=47 // pred_region
        %p485 = scmp.lt.s32.totalorder %s24, 1
        %s486 = scalar_select %p485, %s24, 1
        %p487 = scmp.lt.s32.totalorder %s25, 1
        %s488 = scalar_select %p487, %s25, 1
        %s489 = smul.addr %s486, 2
        %s490 = sadd.s32 %s488, %s489
        %s491 = scalar_lea.vmem %s4, %s490
      $region56: #{cvae_forward.4} parent=47 // pred_fallthru
        _
    $region48: #{cvae_forward.4} parent=5 // pred_fallthru
      _
  $region6: #{cvae_forward.4} parent=0 // loop_footer
    %s15 = sadd.s32 1, %s11
  $region7: #{cvae_forward.4} parent=0 // loop_footer_branch
    %10 = sbr.rel target = $region3
  $region8: #{cvae_forward.4} parent=0 // loop_exit
    _

// kernel: cvae_forward.6
$region0: #{cvae_forward.6}
  #allocation0 [shape = 'u32[]', space=smem, size = 0x4, offset = 0x4, fixed_abs, tag = 'smem constant byte address 0x4 - core index']
  #allocation1 [shape = 'u32[144,128]{1,0:T(1,128)}', space=vmem, size = 0x12000, scoped, tag = 'internal scratch']
  %s0 = inlined_call_operand.vmem [shape: f32[2,128], index: 0, kind: input, shape index: {}]
  %s1 = inlined_call_operand.vmem [shape: f32[2,128], index: 1, kind: input, shape index: {}]
  %s2 = inlined_call_operand.vmem [shape: f32[2,128], index: 2, kind: input, shape index: {}]
  %s3 = inlined_call_operand.vmem [shape: f32[2,64], index: 3, kind: input, shape index: {}]
  %s4 = inlined_call_operand.vmem [shape: f32[128,128], index: 4, kind: input, shape index: {}]
  %s5 = inlined_call_operand.vmem [shape: f32[1,128], index: 5, kind: input, shape index: {}]
  %s6 = inlined_call_operand.vmem [shape: f32[128,128], index: 6, kind: input, shape index: {}]
  %s7 = inlined_call_operand.vmem [shape: f32[128,128], index: 7, kind: input, shape index: {}]
  %s8 = inlined_call_operand.vmem [shape: f32[1,128], index: 8, kind: input, shape index: {}]
  %s9 = inlined_call_operand.vmem [shape: f32[2,128], index: 9, kind: output, shape index: {}]
  %s10 = sld [smem:[#allocation0]]
  $region46: #{cvae_forward.6} parent=0
    _
  %s12 = ssub.s32 1, %s10
  %s13 = scalar_select 0, %s12, %s10
  // Predicated region
  $region2: #{cvae_forward.6} parent=0 // pred_check
    _
  $region3: #{cvae_forward.6} parent=0 // pred_check_branch
    %15 = sbr.rel (0) target = $region5
  $region4: #{cvae_forward.6} parent=0 // pred_region
    _
  $region5: #{cvae_forward.6} parent=0 // pred_fallthru
    _
  // Predicated region
  $region6: #{cvae_forward.6} parent=0 // pred_check
    _
  $region7: #{cvae_forward.6} parent=0 // pred_check_branch
    %17 = sbr.rel (0) target = $region9
  $region8: #{cvae_forward.6} parent=0 // pred_region
    _
  $region9: #{cvae_forward.6} parent=0 // pred_fallthru
    _
  // Predicated region
  $region10: #{cvae_forward.6} parent=0 // pred_check
    _
  $region11: #{cvae_forward.6} parent=0 // pred_check_branch
    %19 = sbr.rel (0) target = $region13
  $region12: #{cvae_forward.6} parent=0 // pred_region
    _
  $region13: #{cvae_forward.6} parent=0 // pred_fallthru
    _
  // Predicated region
  $region14: #{cvae_forward.6} parent=0 // pred_check
    _
  $region15: #{cvae_forward.6} parent=0 // pred_check_branch
    %21 = sbr.rel (0) target = $region17
  $region16: #{cvae_forward.6} parent=0 // pred_region
    _
  $region17: #{cvae_forward.6} parent=0 // pred_fallthru
    _
  // Predicated region
  $region18: #{cvae_forward.6} parent=0 // pred_check
    _
  $region19: #{cvae_forward.6} parent=0 // pred_check_branch
    %23 = sbr.rel (0) target = $region21
  $region20: #{cvae_forward.6} parent=0 // pred_region
    _
  $region21: #{cvae_forward.6} parent=0 // pred_fallthru
    _
  // Predicated region
  $region22: #{cvae_forward.6} parent=0 // pred_check
    _
  $region23: #{cvae_forward.6} parent=0 // pred_check_branch
    %25 = sbr.rel (0) target = $region25
  $region24: #{cvae_forward.6} parent=0 // pred_region
    _
  $region25: #{cvae_forward.6} parent=0 // pred_fallthru
    _
  // Predicated region
  $region26: #{cvae_forward.6} parent=0 // pred_check
    _
  $region27: #{cvae_forward.6} parent=0 // pred_check_branch
    %27 = sbr.rel (0) target = $region29
  $region28: #{cvae_forward.6} parent=0 // pred_region
    _
  $region29: #{cvae_forward.6} parent=0 // pred_fallthru
    _
  // Predicated region
  $region30: #{cvae_forward.6} parent=0 // pred_check
    _
  $region31: #{cvae_forward.6} parent=0 // pred_check_branch
    %29 = sbr.rel (0) target = $region33
  $region32: #{cvae_forward.6} parent=0 // pred_region
    _
  $region33: #{cvae_forward.6} parent=0 // pred_fallthru
    _
  // Predicated region
  $region34: #{cvae_forward.6} parent=0 // pred_check
    _
  $region35: #{cvae_forward.6} parent=0 // pred_check_branch
    %31 = sbr.rel (0) target = $region37
  $region36: #{cvae_forward.6} parent=0 // pred_region
    _
  $region37: #{cvae_forward.6} parent=0 // pred_fallthru
    _
  %v32 = vld [vmem:[%s0] sm:$0x3]
  %v33 = vld [vmem:[%s4] sm:$0xff]
  %v34 = vld [vmem:[%s4 + $0x8] sm:$0xff]
  %v35 = vld [vmem:[%s4 + $0x10] sm:$0xff]
  %v36 = vld [vmem:[%s4 + $0x18] sm:$0xff]
  %v37 = vld [vmem:[%s4 + $0x20] sm:$0xff]
  %v38 = vld [vmem:[%s4 + $0x28] sm:$0xff]
  %v39 = vld [vmem:[%s4 + $0x30] sm:$0xff]
  %v40 = vld [vmem:[%s4 + $0x38] sm:$0xff]
  %v41 = vld [vmem:[%s4 + $0x40] sm:$0xff]
  %v42 = vld [vmem:[%s4 + $0x48] sm:$0xff]
  %v43 = vld [vmem:[%s4 + $0x50] sm:$0xff]
  %v44 = vld [vmem:[%s4 + $0x58] sm:$0xff]
  %v45 = vld [vmem:[%s4 + $0x60] sm:$0xff]
  %v46 = vld [vmem:[%s4 + $0x68] sm:$0xff]
  %v47 = vld [vmem:[%s4 + $0x70] sm:$0xff]
  %v48 = vld [vmem:[%s4 + $0x78] sm:$0xff]
  %v49 = vld [vmem:[%s5] sm:$0x1]
  %v51 = vlaneseq
  %v52 = vshrl.u32 %v51, 7
  %v53 = vsub.s32 0, %v52
  %v54 = vrot.slane %v49, %v53
  %56 = vmatprep.subr.mxu0 0.0
  %57 = vmatpush1.msra.mxu0 %v33
  %58 = vmatprep.subr.mxu0 0.0
  %59 = vmatpush1.msra.mxu0 %v34
  %60 = vmatprep.subr.mxu0 0.0
  %61 = vmatpush1.msra.mxu0 %v35
  %62 = vmatprep.subr.mxu0 0.0
  %63 = vmatpush1.msra.mxu0 %v36
  %64 = vmatprep.subr.mxu0 0.0
  %65 = vmatpush1.msra.mxu0 %v37
  %66 = vmatprep.subr.mxu0 0.0
  %67 = vmatpush1.msra.mxu0 %v38
  %68 = vmatprep.subr.mxu0 0.0
  %69 = vmatpush1.msra.mxu0 %v39
  %70 = vmatprep.subr.mxu0 0.0
  %71 = vmatpush1.msra.mxu0 %v40
  %72 = vmatprep.subr.mxu0 0.0
  %73 = vmatpush1.msra.mxu0 %v41
  %74 = vmatprep.subr.mxu0 0.0
  %75 = vmatpush1.msra.mxu0 %v42
  %76 = vmatprep.subr.mxu0 0.0
  %77 = vmatpush1.msra.mxu0 %v43
  %78 = vmatprep.subr.mxu0 0.0
  %79 = vmatpush1.msra.mxu0 %v44
  %80 = vmatprep.subr.mxu0 0.0
  %81 = vmatpush1.msra.mxu0 %v45
  %82 = vmatprep.subr.mxu0 0.0
  %83 = vmatpush1.msra.mxu0 %v46
  %84 = vmatprep.subr.mxu0 0.0
  %85 = vmatpush1.msra.mxu0 %v47
  %86 = vmatprep.subr.mxu0 0.0
  %87 = vmatpush1.msra.mxu0 %v48
  %88 = vmatprep.subr.mxu0 0.0
  %89 = vmatpush1.msra.mxu0 0.0
  %90 = vmatprep.subr.mxu0 0.0
  %91 = vmatpush1.msra.mxu0 0.0
  %92 = vmatprep.subr.mxu0 0.0
  %93 = vmatpush1.msra.mxu0 0.0
  %94 = vmatprep.subr.mxu0 0.0
  %95 = vmatpush1.msra.mxu0 0.0
  %96 = vmatprep.subr.mxu0 0.0
  %97 = vmatpush1.msra.mxu0 0.0
  %98 = vmatprep.subr.mxu0 0.0
  %99 = vmatpush1.msra.mxu0 0.0
  %100 = vmatprep.subr.mxu0 0.0
  %101 = vmatpush1.msra.mxu0 0.0
  %102 = vmatprep.subr.mxu0 0.0
  %103 = vmatpush1.msra.mxu0 0.0
  %104 = vmatprep.subr.mxu0 0.0
  %105 = vmatpush1.msra.mxu0 0.0
  %106 = vmatprep.subr.mxu0 0.0
  %107 = vmatpush1.msra.mxu0 0.0
  %108 = vmatprep.subr.mxu0 0.0
  %109 = vmatpush1.msra.mxu0 0.0
  %110 = vmatprep.subr.mxu0 0.0
  %111 = vmatpush1.msra.mxu0 0.0
  %112 = vmatprep.subr.mxu0 0.0
  %113 = vmatpush1.msra.mxu0 0.0
  %114 = vmatprep.subr.mxu0 0.0
  %115 = vmatpush1.msra.mxu0 0.0
  %116 = vmatprep.subr.mxu0 0.0
  %117 = vmatpush1.msra.mxu0 0.0
  %118 = vmatprep.subr.mxu0 0.0
  %119 = vmatpush1.msra.mxu0 0.0
  %120 = vmatprep.mubr.f32.mxu0 0.0
  %121 = vmatmul.mubr.f32.gmra.mrb[0].mxu0 %v32
  %v122 = vpop.f32.mrb[0].mxu0
  %v123 = vadd.f32 %v54, %v122
  %v124 = vpop.f32.mrb[0].mxu0
  %125 = vdwg.mxu0
  %v126 = vld [vmem:[%s1] sm:$0x3]
  %v127 = vld [vmem:[%s6] sm:$0xff]
  %v128 = vld [vmem:[%s6 + $0x8] sm:$0xff]
  %v129 = vld [vmem:[%s6 + $0x10] sm:$0xff]
  %v130 = vld [vmem:[%s6 + $0x18] sm:$0xff]
  %v131 = vld [vmem:[%s6 + $0x20] sm:$0xff]
  %v132 = vld [vmem:[%s6 + $0x28] sm:$0xff]
  %v133 = vld [vmem:[%s6 + $0x30] sm:$0xff]
  %v134 = vld [vmem:[%s6 + $0x38] sm:$0xff]
  %v135 = vld [vmem:[%s6 + $0x40] sm:$0xff]
  %v136 = vld [vmem:[%s6 + $0x48] sm:$0xff]
  %v137 = vld [vmem:[%s6 + $0x50] sm:$0xff]
  %v138 = vld [vmem:[%s6 + $0x58] sm:$0xff]
  %v139 = vld [vmem:[%s6 + $0x60] sm:$0xff]
  %v140 = vld [vmem:[%s6 + $0x68] sm:$0xff]
  %v141 = vld [vmem:[%s6 + $0x70] sm:$0xff]
  %v142 = vld [vmem:[%s6 + $0x78] sm:$0xff]
  %v143 = vld [vmem:[%s2] sm:$0x3]
  %v144 = vld [vmem:[%s7] sm:$0xff]
  %v145 = vld [vmem:[%s7 + $0x8] sm:$0xff]
  %v146 = vld [vmem:[%s7 + $0x10] sm:$0xff]
  %v147 = vld [vmem:[%s7 + $0x18] sm:$0xff]
  %v148 = vld [vmem:[%s7 + $0x20] sm:$0xff]
  %v149 = vld [vmem:[%s7 + $0x28] sm:$0xff]
  %v150 = vld [vmem:[%s7 + $0x30] sm:$0xff]
  %v151 = vld [vmem:[%s7 + $0x38] sm:$0xff]
  %v152 = vld [vmem:[%s7 + $0x40] sm:$0xff]
  %v153 = vld [vmem:[%s7 + $0x48] sm:$0xff]
  %v154 = vld [vmem:[%s7 + $0x50] sm:$0xff]
  %v155 = vld [vmem:[%s7 + $0x58] sm:$0xff]
  %v156 = vld [vmem:[%s7 + $0x60] sm:$0xff]
  %v157 = vld [vmem:[%s7 + $0x68] sm:$0xff]
  %v158 = vld [vmem:[%s7 + $0x70] sm:$0xff]
  %v159 = vld [vmem:[%s7 + $0x78] sm:$0xff]
  %160 = vmatprep.subr.mxu0 0.0
  %161 = vmatpush1.msra.mxu0 %v144
  %162 = vmatprep.subr.mxu0 0.0
  %163 = vmatpush1.msra.mxu0 %v145
  %164 = vmatprep.subr.mxu0 0.0
  %165 = vmatpush1.msra.mxu0 %v146
  %166 = vmatprep.subr.mxu0 0.0
  %167 = vmatpush1.msra.mxu0 %v147
  %168 = vmatprep.subr.mxu0 0.0
  %169 = vmatpush1.msra.mxu0 %v148
  %170 = vmatprep.subr.mxu0 0.0
  %171 = vmatpush1.msra.mxu0 %v149
  %172 = vmatprep.subr.mxu0 0.0
  %173 = vmatpush1.msra.mxu0 %v150
  %174 = vmatprep.subr.mxu0 0.0
  %175 = vmatpush1.msra.mxu0 %v151
  %176 = vmatprep.subr.mxu0 0.0
  %177 = vmatpush1.msra.mxu0 %v152
  %178 = vmatprep.subr.mxu0 0.0
  %179 = vmatpush1.msra.mxu0 %v153
  %180 = vmatprep.subr.mxu0 0.0
  %181 = vmatpush1.msra.mxu0 %v154
  %182 = vmatprep.subr.mxu0 0.0
  %183 = vmatpush1.msra.mxu0 %v155
  %184 = vmatprep.subr.mxu0 0.0
  %185 = vmatpush1.msra.mxu0 %v156
  %186 = vmatprep.subr.mxu0 0.0
  %187 = vmatpush1.msra.mxu0 %v157
  %188 = vmatprep.subr.mxu0 0.0
  %189 = vmatpush1.msra.mxu0 %v158
  %190 = vmatprep.subr.mxu0 0.0
  %191 = vmatpush1.msra.mxu0 %v159
  %192 = vmatprep.subr.mxu0 0.0
  %193 = vmatpush1.msra.mxu0 0.0
  %194 = vmatprep.subr.mxu0 0.0
  %195 = vmatpush1.msra.mxu0 0.0
  %196 = vmatprep.subr.mxu0 0.0
  %197 = vmatpush1.msra.mxu0 0.0
  %198 = vmatprep.subr.mxu0 0.0
  %199 = vmatpush1.msra.mxu0 0.0
  %200 = vmatprep.subr.mxu0 0.0
  %201 = vmatpush1.msra.mxu0 0.0
  %202 = vmatprep.subr.mxu0 0.0
  %203 = vmatpush1.msra.mxu0 0.0
  %204 = vmatprep.subr.mxu0 0.0
  %205 = vmatpush1.msra.mxu0 0.0
  %206 = vmatprep.subr.mxu0 0.0
  %207 = vmatpush1.msra.mxu0 0.0
  %208 = vmatprep.subr.mxu0 0.0
  %209 = vmatpush1.msra.mxu0 0.0
  %210 = vmatprep.subr.mxu0 0.0
  %211 = vmatpush1.msra.mxu0 0.0
  %212 = vmatprep.subr.mxu0 0.0
  %213 = vmatpush1.msra.mxu0 0.0
  %214 = vmatprep.subr.mxu0 0.0
  %215 = vmatpush1.msra.mxu0 0.0
  %216 = vmatprep.subr.mxu0 0.0
  %217 = vmatpush1.msra.mxu0 0.0
  %218 = vmatprep.subr.mxu0 0.0
  %219 = vmatpush1.msra.mxu0 0.0
  %220 = vmatprep.subr.mxu0 0.0
  %221 = vmatpush1.msra.mxu0 0.0
  %222 = vmatprep.subr.mxu0 0.0
  %223 = vmatpush1.msra.mxu0 0.0
  %224 = vmatprep.mubr.f32.mxu0 0.0
  %225 = vmatmul.mubr.f32.gmra.mrb[0].mxu0 %v143
  %v226 = vpop.f32.mrb[0].mxu0
  %v227 = vadd.f32 0.0, %v226
  %v228 = vpop.f32.mrb[0].mxu0
  %229 = vdwg.mxu0
  %230 = vmatprep.subr.mxu0 0.0
  %231 = vmatpush1.msra.mxu0 %v127
  %232 = vmatprep.subr.mxu0 0.0
  %233 = vmatpush1.msra.mxu0 %v128
  %234 = vmatprep.subr.mxu0 0.0
  %235 = vmatpush1.msra.mxu0 %v129
  %236 = vmatprep.subr.mxu0 0.0
  %237 = vmatpush1.msra.mxu0 %v130
  %238 = vmatprep.subr.mxu0 0.0
  %239 = vmatpush1.msra.mxu0 %v131
  %240 = vmatprep.subr.mxu0 0.0
  %241 = vmatpush1.msra.mxu0 %v132
  %242 = vmatprep.subr.mxu0 0.0
  %243 = vmatpush1.msra.mxu0 %v133
  %244 = vmatprep.subr.mxu0 0.0
  %245 = vmatpush1.msra.mxu0 %v134
  %246 = vmatprep.subr.mxu0 0.0
  %247 = vmatpush1.msra.mxu0 %v135
  %248 = vmatprep.subr.mxu0 0.0
  %249 = vmatpush1.msra.mxu0 %v136
  %250 = vmatprep.subr.mxu0 0.0
  %251 = vmatpush1.msra.mxu0 %v137
  %252 = vmatprep.subr.mxu0 0.0
  %253 = vmatpush1.msra.mxu0 %v138
  %254 = vmatprep.subr.mxu0 0.0
  %255 = vmatpush1.msra.mxu0 %v139
  %256 = vmatprep.subr.mxu0 0.0
  %257 = vmatpush1.msra.mxu0 %v140
  %258 = vmatprep.subr.mxu0 0.0
  %259 = vmatpush1.msra.mxu0 %v141
  %260 = vmatprep.subr.mxu0 0.0
  %261 = vmatpush1.msra.mxu0 %v142
  %262 = vmatprep.subr.mxu0 0.0
  %263 = vmatpush1.msra.mxu0 0.0
  %264 = vmatprep.subr.mxu0 0.0
  %265 = vmatpush1.msra.mxu0 0.0
  %266 = vmatprep.subr.mxu0 0.0
  %267 = vmatpush1.msra.mxu0 0.0
  %268 = vmatprep.subr.mxu0 0.0
  %269 = vmatpush1.msra.mxu0 0.0
  %270 = vmatprep.subr.mxu0 0.0
  %271 = vmatpush1.msra.mxu0 0.0
  %272 = vmatprep.subr.mxu0 0.0
  %273 = vmatpush1.msra.mxu0 0.0
  %274 = vmatprep.subr.mxu0 0.0
  %275 = vmatpush1.msra.mxu0 0.0
  %276 = vmatprep.subr.mxu0 0.0
  %277 = vmatpush1.msra.mxu0 0.0
  %278 = vmatprep.subr.mxu0 0.0
  %279 = vmatpush1.msra.mxu0 0.0
  %280 = vmatprep.subr.mxu0 0.0
  %281 = vmatpush1.msra.mxu0 0.0
  %282 = vmatprep.subr.mxu0 0.0
  %283 = vmatpush1.msra.mxu0 0.0
  %284 = vmatprep.subr.mxu0 0.0
  %285 = vmatpush1.msra.mxu0 0.0
  %286 = vmatprep.subr.mxu0 0.0
  %287 = vmatpush1.msra.mxu0 0.0
  %288 = vmatprep.subr.mxu0 0.0
  %289 = vmatpush1.msra.mxu0 0.0
  %290 = vmatprep.subr.mxu0 0.0
  %291 = vmatpush1.msra.mxu0 0.0
  %292 = vmatprep.subr.mxu0 0.0
  %293 = vmatpush1.msra.mxu0 0.0
  %294 = vmatprep.mubr.f32.mxu0 0.0
  %295 = vmatmul.mubr.f32.gmra.mrb[0].mxu0 %v126
  %v296 = vpop.f32.mrb[0].mxu0
  %v297 = vadd.f32 %v227, %v296
  %v298 = vpop.f32.mrb[0].mxu0
  %299 = vdwg.mxu0
  %v300 = vld [vmem:[%s8] sm:$0x1]
  %v302 = vlaneseq
  %v303 = vshrl.u32 %v302, 7
  %v304 = vsub.s32 0, %v303
  %v305 = vrot.slane %v300, %v304
  %v307 = vadd.f32 %v297, %v305
  %v308 = vmul.f32 %v307, 1.442695
  %v309 = vpow.pop %v308
  %v310 = vsub.f32 0.0, %v123
  %v311 = vmul.f32 %v310, 1.442695
  %v312 = vpow.pop %v311
  %v313 = vsub.f32 %v123, %v307
  %v314 = vmul.f32 %v313, 0.5
  %v315 = vsub.f32 %v307, %v123
  %v316 = vmul.f32 %v315, %v315
  %318 = vrot.lane.b32.xlu0 %v316, 64
  %v319 = vpop.permute.xlu0 %318
  %v321 = vadd.f32 %v309, %v319
  %v322 = vmul.f32 %v321, 0.5
  %v323 = vmul.f32 %v322, %v312
  %v324 = vadd.f32 %v314, %v323
  %v325 = vsub.f32 %v324, 0.5
  %v326 = vmul.f32 %v307, 0.5
  %v327 = vmul.f32 %v326, 1.442695
  %v328 = vpow.pop %v327
  %v329 = vld [vmem:[%s3] sm:$0x3]
  %331 = vrot.lane.b32.xlu0 %v329, 64
  %v332 = vpop.permute.xlu0 %331
  %v334 = vmul.f32 %v328, %v332
  %336 = vrot.lane.b32.xlu0 %v334, 64
  %v337 = vpop.permute.xlu0 %336
  %v339 = vadd.f32 %v307, %v337
  %341 = vrot.lane.b32.xlu0 %v325, 64
  %v342 = vpop.permute.xlu0 %341
  %345 = vrot.lane.b32.xlu0 %v339, 64
  %v346 = vpop.permute.xlu0 %345
  %vm348 = vcmask 523264
  %v349 = vsel %vm348, %v342, %v346
  %350 = vst [vmem:[%s9] sm:$0x3] %v349
  // Predicated region
  $region38: #{cvae_forward.6} parent=0 // pred_check
    _
  $region39: #{cvae_forward.6} parent=0 // pred_check_branch
    %352 = sbr.rel (0) target = $region41
  $region40: #{cvae_forward.6} parent=0 // pred_region
    _
  $region41: #{cvae_forward.6} parent=0 // pred_fallthru
    _
  // Predicated region
  $region42: #{cvae_forward.6} parent=0 // pred_check
    _
  $region43: #{cvae_forward.6} parent=0 // pred_check_branch
    %354 = sbr.rel (0) target = $region45
  $region44: #{cvae_forward.6} parent=0 // pred_region
    _
  $region45: #{cvae_forward.6} parent=0 // pred_fallthru
    _

// kernel: cvae_forward.7
$region0: #{cvae_forward.7}
  #allocation0 [shape = 'u32[]', space=smem, size = 0x4, offset = 0x4, fixed_abs, tag = 'smem constant byte address 0x4 - core index']
  #allocation1 [shape = 'u32[144,128]{1,0:T(1,128)}', space=vmem, size = 0x12000, scoped, tag = 'internal scratch']
  %s0 = inlined_call_operand.vmem [shape: bf16[2,8,128], index: 0, kind: input, shape index: {}]
  %s1 = inlined_call_operand.vmem [shape: f32[2,1,64], index: 1, kind: input, shape index: {}]
  %s2 = inlined_call_operand.vmem [shape: bf16[128,128], index: 2, kind: input, shape index: {}]
  %s3 = inlined_call_operand.vmem [shape: bf16[64,128], index: 3, kind: input, shape index: {}]
  %s4 = inlined_call_operand.vmem [shape: f32[1,128], index: 4, kind: input, shape index: {}]
  %s5 = inlined_call_operand.vmem [shape: bf16[128,256], index: 5, kind: input, shape index: {}]
  %s6 = inlined_call_operand.vmem [shape: f32[1,256], index: 6, kind: input, shape index: {}]
  %s7 = inlined_call_operand.hbm [shape: f32[2,8,256], index: 7, kind: output, shape index: {0}]
  %s8 = inlined_call_operand.hbm [shape: f32[2,1,128], index: 8, kind: output, shape index: {1}]
  %9 = xla_tuple %s7, %s8
  %s10 = sld [smem:[#allocation0]]
  $region73: #{cvae_forward.7} parent=0
    _
  %s12 = ssub.s32 1, %s10
  %s13 = scalar_select 0, %s12, %s10
  $region1: #{cvae_forward.7} parent=0
    #allocation2 [shape = 'u8[16384]{0}', space=vmem, size = 0x4000, scoped, tag = 'output window, operand 0']
    #allocation3 [shape = 's32[2]{0}', space=sflag, size = 0x8, scoped, tag = 'scoped memory for cvae_forward.7']
    #allocation4 [shape = 'u8[1024]{0}', space=vmem, size = 0x400, scoped, tag = 'output window, operand 1']
    #allocation5 [shape = 's32[2]{0}', space=sflag, size = 0x8, scoped, tag = 'scoped memory for cvae_forward.7']
    %14 = vsyncpa [#allocation3], 0
    %s15 = scalar_lea.sflag [#allocation3], 1
    %16 = vsyncpa %s15, 0
    %17 = vsyncpa [#allocation5], 0
    %s18 = scalar_lea.sflag [#allocation5], 1
    %19 = vsyncpa %s18, 0
    loop: start=0, step=1, limit=4
    $region2: #{cvae_forward.7} parent=1 // loop_pre_header
      _
    $region3: #{cvae_forward.7} parent=1 // loop_header
      %s21 = sphi 0, %s25
      %p22 = scmp.ge.s32.totalorder %s21, 4
      %s28 = sphi 0, %s40
      %s29 = sphi 0, %s36
      %s30 = sphi 0, %s28
      %s31 = sphi 0, %s29
      %s32 = sphi 0, %s30
      %s33 = sphi 0, %s31
      %s45 = sphi 0, %s47
      %s48 = sphi 0, %s45
      %s49 = sphi 0, %s48
      %s65 = sphi 0, %s49
      %s71 = sphi 0, %s73
      %s74 = sphi 0, %s71
      %s75 = sphi 0, %s74
      %s91 = sphi 0, %s75
      %s95 = sphi 0, %s95
      %s97 = sphi 0, %s95
      %s98 = sphi 0, %s97
      %s112 = sphi 0, %s98
      %s116 = sphi 0, %s116
      %s118 = sphi 0, %s116
      %s119 = sphi 0, %s118
      %s133 = sphi 0, %s119
      %s137 = sphi 0, %s137
      %s139 = sphi 0, %s137
      %s140 = sphi 0, %s139
      %s154 = sphi 0, %s140
      %s158 = sphi 0, %s158
      %s160 = sphi 0, %s158
      %s161 = sphi 0, %s160
      %s175 = sphi 0, %s161
      %s179 = sphi 0, %s179
      %s181 = sphi 0, %s179
      %s182 = sphi 0, %s181
      %s196 = sphi 0, %s182
      %s204 = sphi 0, %s206
      %s207 = sphi 0, %s204
      %s208 = sphi 0, %s207
      %s224 = sphi 0, %s208
      %s230 = sphi 0, %s232
      %s233 = sphi 0, %s230
      %s234 = sphi 0, %s233
      %s250 = sphi 0, %s234
    $region4: #{cvae_forward.7} parent=1 // loop_header_branch
      %24 = sbr.rel (%p22) target = $region8
    $region5: #{cvae_forward.7} parent=1 // loop_body
      %s26 = ssub.s32 %s21, 1
      %s27 = ssub.s32 %s21, 2
      %s34 = sadd.s32 1, %s29
      %p35 = scmp.ge.s32.totalorder %s34, 1
      %s36 = scalar_select %p35, 0, %s34
      %s37 = sadd.s32 1, %s28
      %s38 = scalar_select %p35, %s37, %s28
      %p39 = scmp.ge.s32.totalorder %s38, 2
      %s40 = scalar_select %p39, 0, %s38
      %s41 = ssub.s32 %s28, %s40
      %s42 = ssub.s32 %s29, %s36
      %s43 = sor.u32 %s41, %s42
      %p44 = scmp.eq.s32.totalorder %s43, 0
      %s46 = sadd.s32 %s45, 1
      %s47 = scalar_select %p44, %s45, %s46
      %p50 = pneg %p44
      %p51 = scmp.eq.s32.totalorder %s21, 1
      %p52 = por %p50, %p51
      %p53 = scmp.ne.s32.totalorder %s45, %s48
      %p54 = scmp.eq.s32.totalorder %s21, 0
      %p55 = por %p53, %p54
      %p56 = scmp.ne.s32.totalorder %s45, %s48
      %p57 = scmp.eq.s32.totalorder %s26, 1
      %p58 = por %p56, %p57
      %p59 = scmp.ne.s32.totalorder %s48, %s49
      %p60 = scmp.eq.s32.totalorder %s26, 0
      %p61 = por %p59, %p60
      %p62 = scmp.ne.s32.totalorder %s48, %s49
      %p63 = scmp.eq.s32.totalorder %s27, 1
      %p64 = por %p62, %p63
      %p66 = scmp.ne.s32.totalorder %s49, %s65
      %p67 = scmp.eq.s32.totalorder %s27, 0
      %p68 = por %p66, %p67
      %s69 = ssub.s32 %s28, %s40
      %p70 = scmp.eq.s32.totalorder %s69, 0
      %s72 = sadd.s32 %s71, 1
      %s73 = scalar_select %p70, %s71, %s72
      %p76 = pneg %p70
      %p77 = scmp.eq.s32.totalorder %s21, 1
      %p78 = por %p76, %p77
      %p79 = scmp.ne.s32.totalorder %s71, %s74
      %p80 = scmp.eq.s32.totalorder %s21, 0
      %p81 = por %p79, %p80
      %p82 = scmp.ne.s32.totalorder %s71, %s74
      %p83 = scmp.eq.s32.totalorder %s26, 1
      %p84 = por %p82, %p83
      %p85 = scmp.ne.s32.totalorder %s74, %s75
      %p86 = scmp.eq.s32.totalorder %s26, 0
      %p87 = por %p85, %p86
      %p88 = scmp.ne.s32.totalorder %s74, %s75
      %p89 = scmp.eq.s32.totalorder %s27, 1
      %p90 = por %p88, %p89
      %p92 = scmp.ne.s32.totalorder %s75, %s91
      %p93 = scmp.eq.s32.totalorder %s27, 0
      %p94 = por %p92, %p93
      %s96 = sadd.s32 %s95, 1
      %p99 = scmp.eq.s32.totalorder %s21, 1
      %p100 = scmp.ne.s32.totalorder %s95, %s97
      %p101 = scmp.eq.s32.totalorder %s21, 0
      %p102 = por %p100, %p101
      %p103 = scmp.ne.s32.totalorder %s95, %s97
      %p104 = scmp.eq.s32.totalorder %s26, 1
      %p105 = por %p103, %p104
      %p106 = scmp.ne.s32.totalorder %s97, %s98
      %p107 = scmp.eq.s32.totalorder %s26, 0
      %p108 = por %p106, %p107
      %p109 = scmp.ne.s32.totalorder %s97, %s98
      %p110 = scmp.eq.s32.totalorder %s27, 1
      %p111 = por %p109, %p110
      %p113 = scmp.ne.s32.totalorder %s98, %s112
      %p114 = scmp.eq.s32.totalorder %s27, 0
      %p115 = por %p113, %p114
      %s117 = sadd.s32 %s116, 1
      %p120 = scmp.eq.s32.totalorder %s21, 1
      %p121 = scmp.ne.s32.totalorder %s116, %s118
      %p122 = scmp.eq.s32.totalorder %s21, 0
      %p123 = por %p121, %p122
      %p124 = scmp.ne.s32.totalorder %s116, %s118
      %p125 = scmp.eq.s32.totalorder %s26, 1
      %p126 = por %p124, %p125
      %p127 = scmp.ne.s32.totalorder %s118, %s119
      %p128 = scmp.eq.s32.totalorder %s26, 0
      %p129 = por %p127, %p128
      %p130 = scmp.ne.s32.totalorder %s118, %s119
      %p131 = scmp.eq.s32.totalorder %s27, 1
      %p132 = por %p130, %p131
      %p134 = scmp.ne.s32.totalorder %s119, %s133
      %p135 = scmp.eq.s32.totalorder %s27, 0
      %p136 = por %p134, %p135
      %s138 = sadd.s32 %s137, 1
      %p141 = scmp.eq.s32.totalorder %s21, 1
      %p142 = scmp.ne.s32.totalorder %s137, %s139
      %p143 = scmp.eq.s32.totalorder %s21, 0
      %p144 = por %p142, %p143
      %p145 = scmp.ne.s32.totalorder %s137, %s139
      %p146 = scmp.eq.s32.totalorder %s26, 1
      %p147 = por %p145, %p146
      %p148 = scmp.ne.s32.totalorder %s139, %s140
      %p149 = scmp.eq.s32.totalorder %s26, 0
      %p150 = por %p148, %p149
      %p151 = scmp.ne.s32.totalorder %s139, %s140
      %p152 = scmp.eq.s32.totalorder %s27, 1
      %p153 = por %p151, %p152
      %p155 = scmp.ne.s32.totalorder %s140, %s154
      %p156 = scmp.eq.s32.totalorder %s27, 0
      %p157 = por %p155, %p156
      %s159 = sadd.s32 %s158, 1
      %p162 = scmp.eq.s32.totalorder %s21, 1
      %p163 = scmp.ne.s32.totalorder %s158, %s160
      %p164 = scmp.eq.s32.totalorder %s21, 0
      %p165 = por %p163, %p164
      %p166 = scmp.ne.s32.totalorder %s158, %s160
      %p167 = scmp.eq.s32.totalorder %s26, 1
      %p168 = por %p166, %p167
      %p169 = scmp.ne.s32.totalorder %s160, %s161
      %p170 = scmp.eq.s32.totalorder %s26, 0
      %p171 = por %p169, %p170
      %p172 = scmp.ne.s32.totalorder %s160, %s161
      %p173 = scmp.eq.s32.totalorder %s27, 1
      %p174 = por %p172, %p173
      %p176 = scmp.ne.s32.totalorder %s161, %s175
      %p177 = scmp.eq.s32.totalorder %s27, 0
      %p178 = por %p176, %p177
      %s180 = sadd.s32 %s179, 1
      %p183 = scmp.eq.s32.totalorder %s21, 1
      %p184 = scmp.ne.s32.totalorder %s179, %s181
      %p185 = scmp.eq.s32.totalorder %s21, 0
      %p186 = por %p184, %p185
      %p187 = scmp.ne.s32.totalorder %s179, %s181
      %p188 = scmp.eq.s32.totalorder %s26, 1
      %p189 = por %p187, %p188
      %p190 = scmp.ne.s32.totalorder %s181, %s182
      %p191 = scmp.eq.s32.totalorder %s26, 0
      %p192 = por %p190, %p191
      %p193 = scmp.ne.s32.totalorder %s181, %s182
      %p194 = scmp.eq.s32.totalorder %s27, 1
      %p195 = por %p193, %p194
      %p197 = scmp.ne.s32.totalorder %s182, %s196
      %p198 = scmp.eq.s32.totalorder %s27, 0
      %p199 = por %p197, %p198
      %s200 = ssub.s32 %s28, %s40
      %s201 = ssub.s32 %s29, %s36
      %s202 = sor.u32 %s200, %s201
      %p203 = scmp.eq.s32.totalorder %s202, 0
      %s205 = sadd.s32 %s204, 1
      %s206 = scalar_select %p203, %s204, %s205
      %p209 = pneg %p203
      %p210 = scmp.eq.s32.totalorder %s21, 1
      %p211 = por %p209, %p210
      %p212 = scmp.ne.s32.totalorder %s204, %s207
      %p213 = scmp.eq.s32.totalorder %s21, 0
      %p214 = por %p212, %p213
      %p215 = scmp.ne.s32.totalorder %s204, %s207
      %p216 = scmp.eq.s32.totalorder %s26, 1
      %p217 = por %p215, %p216
      %p218 = scmp.ne.s32.totalorder %s207, %s208
      %p219 = scmp.eq.s32.totalorder %s26, 0
      %p220 = por %p218, %p219
      %p221 = scmp.ne.s32.totalorder %s207, %s208
      %p222 = scmp.eq.s32.totalorder %s27, 1
      %p223 = por %p221, %p222
      %p225 = scmp.ne.s32.totalorder %s208, %s224
      %p226 = scmp.eq.s32.totalorder %s27, 0
      %p227 = por %p225, %p226
      %s228 = ssub.s32 %s28, %s40
      %p229 = scmp.eq.s32.totalorder %s228, 0
      %s231 = sadd.s32 %s230, 1
      %s232 = scalar_select %p229, %s230, %s231
      %p235 = pneg %p229
      %p236 = scmp.eq.s32.totalorder %s21, 1
      %p237 = por %p235, %p236
      %p238 = scmp.ne.s32.totalorder %s230, %s233
      %p239 = scmp.eq.s32.totalorder %s21, 0
      %p240 = por %p238, %p239
      %p241 = scmp.ne.s32.totalorder %s230, %s233
      %p242 = scmp.eq.s32.totalorder %s26, 1
      %p243 = por %p241, %p242
      %p244 = scmp.ne.s32.totalorder %s233, %s234
      %p245 = scmp.eq.s32.totalorder %s26, 0
      %p246 = por %p244, %p245
      %p247 = scmp.ne.s32.totalorder %s233, %s234
      %p248 = scmp.eq.s32.totalorder %s27, 1
      %p249 = por %p247, %p248
      %p251 = scmp.ne.s32.totalorder %s234, %s250
      %p252 = scmp.eq.s32.totalorder %s27, 0
      %p253 = por %p251, %p252
      %p254 = scmp.le.s32.totalorder 1, %s21
      %p255 = scmp.lt.s32.totalorder %s21, 3
      %p256 = pnand %p254, %p255
      %p257 = pneg %p256
      // Predicated region
      $region9: #{cvae_forward.7} parent=5 // pred_check
        _
      $region10: #{cvae_forward.7} parent=5 // pred_check_branch
        %259 = sbr.rel (%p256) target = $region12
      $region11: #{cvae_forward.7} parent=5 // pred_region
        %s260 = ssub.s32 %s21, 1
        // Predicated region
        $region13: #{cvae_forward.7} parent=11 // pred_check
          %p261 = pneg %p108
        $region14: #{cvae_forward.7} parent=11 // pred_check_branch
          %263 = sbr.rel (%p261) target = $region16
        $region15: #{cvae_forward.7} parent=11 // pred_region
          _
        $region16: #{cvae_forward.7} parent=11 // pred_fallthru
          _
        // Predicated region
        $region17: #{cvae_forward.7} parent=11 // pred_check
          %p264 = pneg %p129
        $region18: #{cvae_forward.7} parent=11 // pred_check_branch
          %266 = sbr.rel (%p264) target = $region20
        $region19: #{cvae_forward.7} parent=11 // pred_region
          _
        $region20: #{cvae_forward.7} parent=11 // pred_fallthru
          _
        // Predicated region
        $region21: #{cvae_forward.7} parent=11 // pred_check
          %p267 = pneg %p150
        $region22: #{cvae_forward.7} parent=11 // pred_check_branch
          %269 = sbr.rel (%p267) target = $region24
        $region23: #{cvae_forward.7} parent=11 // pred_region
          _
        $region24: #{cvae_forward.7} parent=11 // pred_fallthru
          _
        // Predicated region
        $region25: #{cvae_forward.7} parent=11 // pred_check
          %p270 = pneg %p171
        $region26: #{cvae_forward.7} parent=11 // pred_check_branch
          %272 = sbr.rel (%p270) target = $region28
        $region27: #{cvae_forward.7} parent=11 // pred_region
          _
        $region28: #{cvae_forward.7} parent=11 // pred_fallthru
          _
        // Predicated region
        $region29: #{cvae_forward.7} parent=11 // pred_check
          %p273 = pneg %p192
        $region30: #{cvae_forward.7} parent=11 // pred_check_branch
          %275 = sbr.rel (%p273) target = $region32
        $region31: #{cvae_forward.7} parent=11 // pred_region
          _
        $region32: #{cvae_forward.7} parent=11 // pred_fallthru
          _
      $region12: #{cvae_forward.7} parent=5 // pred_fallthru
        _
      %p276 = scmp.lt.s32.totalorder %s21, 2
      // Predicated region
      $region33: #{cvae_forward.7} parent=5 // pred_check
        %p277 = pneg %p276
      $region34: #{cvae_forward.7} parent=5 // pred_check_branch
        %279 = sbr.rel (%p277) target = $region36
      $region35: #{cvae_forward.7} parent=5 // pred_region
        // Predicated region
        $region37: #{cvae_forward.7} parent=35 // pred_check
          %p280 = pneg %p55
        $region38: #{cvae_forward.7} parent=35 // pred_check_branch
          %282 = sbr.rel (%p280) target = $region40
        $region39: #{cvae_forward.7} parent=35 // pred_region
          %p283 = scmp.lt.s32.totalorder %s28, 1
          %s284 = scalar_select %p283, %s28, 1
          %p285 = scmp.lt.s32.totalorder %s29, 0
          %s286 = scalar_select %p285, %s29, 0
          %s287 = sadd.s32 %s286, %s284
          %s288 = smul.addr %s287, 4
          %s289 = scalar_lea.vmem %s0, %s288
        $region40: #{cvae_forward.7} parent=35 // pred_fallthru
          _
        // Predicated region
        $region41: #{cvae_forward.7} parent=35 // pred_check
          %p290 = pneg %p81
        $region42: #{cvae_forward.7} parent=35 // pred_check_branch
          %292 = sbr.rel (%p290) target = $region44
        $region43: #{cvae_forward.7} parent=35 // pred_region
          %p293 = scmp.lt.s32.totalorder %s28, 1
          %s294 = scalar_select %p293, %s28, 1
          %s295 = scalar_lea.vmem %s1, %s294
        $region44: #{cvae_forward.7} parent=35 // pred_fallthru
          _
      $region36: #{cvae_forward.7} parent=5 // pred_fallthru
        _
      %p296 = scmp.le.s32.totalorder 1, %s21
      %p297 = scmp.lt.s32.totalorder %s21, 3
      %p298 = pnand %p296, %p297
      %p299 = pneg %p298
      // Predicated region
      $region45: #{cvae_forward.7} parent=5 // pred_check
        _
      $region46: #{cvae_forward.7} parent=5 // pred_check_branch
        %301 = sbr.rel (%p298) target = $region48
      $region47: #{cvae_forward.7} parent=5 // pred_region
        %s302 = ssub.s32 %s21, 1
        %p303 = scmp.lt.s32.totalorder %s30, 1
        %s304 = scalar_select %p303, %s30, 1
        %p305 = scmp.lt.s32.totalorder %s31, 0
        %s306 = scalar_select %p305, %s31, 0
        %s307 = sadd.s32 %s306, %s304
        %s308 = smul.addr %s307, 4
        %s309 = scalar_lea.vmem %s0, %s308
        %p310 = pneg %p61
        %p311 = pneg %p58
        %p312 = scmp.lt.s32.totalorder %s30, 1
        %s313 = scalar_select %p312, %s30, 1
        %s314 = scalar_lea.vmem %s1, %s313
        %p315 = pneg %p87
        %p316 = pneg %p84
        %p317 = pneg %p108
        %p318 = pneg %p105
        %p319 = pneg %p129
        %p320 = pneg %p126
        %p321 = pneg %p150
        %p322 = pneg %p147
        %p323 = pneg %p171
        %p324 = pneg %p168
        %p325 = pneg %p192
        %p326 = pneg %p189
        %p327 = pneg %p220
        %p328 = pneg %p217
        %s329 = sand.u32 %s207, 1
        %s330 = scalar_lea.sflag [#allocation3], %s329
        %s331 = sand.u32 %s207, 1
        %s332 = smul.addr %s331, 16
        %s333 = scalar_lea.vmem [#allocation2], %s332
        %p334 = pneg %p246
        %p335 = pneg %p243
        %s336 = sand.u32 %s233, 1
        %s337 = scalar_lea.sflag [#allocation5], %s336
        %s338 = sand.u32 %s233, 1
        %s339 = scalar_lea.vmem [#allocation4], %s338
        %p340 = scmp.lt.s32.totalorder %s30, 1
        %s341 = scalar_select %p340, %s30, 1
        %p342 = scmp.lt.s32.totalorder %s31, 0
        %s343 = scalar_select %p342, %s31, 0
        %s344 = sadd.s32 %s343, %s341
        %s345 = smul.addr %s344, 4
        %s346 = scalar_lea.vmem %s0, %s345
        %p347 = scmp.lt.s32.totalorder %s30, 1
        %s348 = scalar_select %p347, %s30, 1
        %s349 = scalar_lea.vmem %s1, %s348
        %v351 = vld [vmem:[%s346] sm:$0xf]
        %v352 = vld [vmem:[%s349] sm:$0x1]
        %v353 = vpack.c.bf16 %v352, %v352
        %v354 = vld [vmem:[%s3] sm:$0xf]
        %v355 = vld [vmem:[%s3 + $0x4] sm:$0xf]
        %v356 = vld [vmem:[%s3 + $0x8] sm:$0xf]
        %v357 = vld [vmem:[%s3 + $0xc] sm:$0xf]
        %v358 = vld [vmem:[%s3 + $0x10] sm:$0xf]
        %v359 = vld [vmem:[%s3 + $0x14] sm:$0xf]
        %v360 = vld [vmem:[%s3 + $0x18] sm:$0xf]
        %v361 = vld [vmem:[%s3 + $0x1c] sm:$0xf]
        %v370 = vunpack.c.l.b16 %v354
        %v371 = vunpack.c.l.b16 %v355
        %v372 = vunpack.c.l.b16 %v356
        %v373 = vunpack.c.l.b16 %v357
        %v374 = vunpack.c.l.b16 %v358
        %v375 = vunpack.c.l.b16 %v359
        %v376 = vunpack.c.l.b16 %v360
        %v377 = vunpack.c.l.b16 %v361
        %v378 = vpack.c.b16 %v371, %v370
        %v379 = vpack.c.b16 %v373, %v372
        %v380 = vpack.c.b16 %v375, %v374
        %v381 = vpack.c.b16 %v377, %v376
        %vm386 = vcmask 523264
        %v388 = vsel %vm386, %v353, 0
        %390 = vmatprep.subr.bf16.mxu0 0
        %391 = vmatpush1.bf16.msra.mxu0 %v378
        %392 = vmatprep.subr.bf16.mxu0 0
        %393 = vmatpush1.bf16.msra.mxu0 %v379
        %394 = vmatprep.subr.bf16.mxu0 0
        %395 = vmatpush1.bf16.msra.mxu0 %v380
        %396 = vmatprep.subr.bf16.mxu0 0
        %397 = vmatpush1.bf16.msra.mxu0 %v381
        %398 = vmatprep.subr.bf16.mxu0 0
        %399 = vmatpush1.bf16.msra.mxu0 0
        %400 = vmatprep.subr.bf16.mxu0 0
        %401 = vmatpush1.bf16.msra.mxu0 0
        %402 = vmatprep.subr.bf16.mxu0 0
        %403 = vmatpush1.bf16.msra.mxu0 0
        %404 = vmatprep.subr.bf16.mxu0 0
        %405 = vmatpush1.bf16.msra.mxu0 0
        %406 = vmatprep.subr.bf16.mxu0 0
        %407 = vmatpush1.bf16.msra.mxu0 0
        %408 = vmatprep.subr.bf16.mxu0 0
        %409 = vmatpush1.bf16.msra.mxu0 0
        %410 = vmatprep.subr.bf16.mxu0 0
        %411 = vmatpush1.bf16.msra.mxu0 0
        %412 = vmatprep.subr.bf16.mxu0 0
        %413 = vmatpush1.bf16.msra.mxu0 0
        %414 = vmatprep.subr.bf16.mxu0 0
        %415 = vmatpush1.bf16.msra.mxu0 0
        %416 = vmatprep.subr.bf16.mxu0 0
        %417 = vmatpush1.bf16.msra.mxu0 0
        %418 = vmatprep.subr.bf16.mxu0 0
        %419 = vmatpush1.bf16.msra.mxu0 0
        %420 = vmatprep.subr.bf16.mxu0 0
        %421 = vmatpush1.bf16.msra.mxu0 0
        %422 = vmatprep.mubr.bf16.mxu0 0
        %423 = vmatmul.mubr.bf16.gmra.mrb[0].mxu0 %v388
        %v424 = vpop.f32.mrb[0].mxu0
        %v425 = vadd.f32 0.0, %v424
        %v426 = vpop.f32.mrb[0].mxu0
        %v427 = vpop.f32.mrb[0].mxu0
        %v428 = vpop.f32.mrb[0].mxu0
        %429 = vdwg.mxu0
        %v430 = vld [vmem:[%s2] sm:$0xf]
        %v431 = vld [vmem:[%s2 + $0x4] sm:$0xf]
        %v432 = vld [vmem:[%s2 + $0x8] sm:$0xf]
        %v433 = vld [vmem:[%s2 + $0xc] sm:$0xf]
        %v434 = vld [vmem:[%s2 + $0x10] sm:$0xf]
        %v435 = vld [vmem:[%s2 + $0x14] sm:$0xf]
        %v436 = vld [vmem:[%s2 + $0x18] sm:$0xf]
        %v437 = vld [vmem:[%s2 + $0x1c] sm:$0xf]
        %v438 = vld [vmem:[%s2 + $0x20] sm:$0xf]
        %v439 = vld [vmem:[%s2 + $0x24] sm:$0xf]
        %v440 = vld [vmem:[%s2 + $0x28] sm:$0xf]
        %v441 = vld [vmem:[%s2 + $0x2c] sm:$0xf]
        %v442 = vld [vmem:[%s2 + $0x30] sm:$0xf]
        %v443 = vld [vmem:[%s2 + $0x34] sm:$0xf]
        %v444 = vld [vmem:[%s2 + $0x38] sm:$0xf]
        %v445 = vld [vmem:[%s2 + $0x3c] sm:$0xf]
        %v446 = vlaneseq
        %v447 = vshrl.u32 %v446, 7
        %v448 = vsub.s32 0, %v447
        %v449 = vrot.slane %v425, %v448
        %v466 = vunpack.c.l.b16 %v430
        %v467 = vunpack.c.l.b16 %v431
        %v468 = vunpack.c.l.b16 %v432
        %v469 = vunpack.c.l.b16 %v433
        %v470 = vunpack.c.l.b16 %v434
        %v471 = vunpack.c.l.b16 %v435
        %v472 = vunpack.c.l.b16 %v436
        %v473 = vunpack.c.l.b16 %v437
        %v474 = vunpack.c.l.b16 %v438
        %v475 = vunpack.c.l.b16 %v439
        %v476 = vunpack.c.l.b16 %v440
        %v477 = vunpack.c.l.b16 %v441
        %v478 = vunpack.c.l.b16 %v442
        %v479 = vunpack.c.l.b16 %v443
        %v480 = vunpack.c.l.b16 %v444
        %v481 = vunpack.c.l.b16 %v445
        %v482 = vpack.c.b16 %v467, %v466
        %v483 = vpack.c.b16 %v469, %v468
        %v484 = vpack.c.b16 %v471, %v470
        %v485 = vpack.c.b16 %v473, %v472
        %v486 = vpack.c.b16 %v475, %v474
        %v487 = vpack.c.b16 %v477, %v476
        %v488 = vpack.c.b16 %v479, %v478
        %v489 = vpack.c.b16 %v481, %v480
        %498 = vmatprep.subr.bf16.mxu0 0
        %499 = vmatpush1.bf16.msra.mxu0 %v482
        %500 = vmatprep.subr.bf16.mxu0 0
        %501 = vmatpush1.bf16.msra.mxu0 %v483
        %502 = vmatprep.subr.bf16.mxu0 0
        %503 = vmatpush1.bf16.msra.mxu0 %v484
        %504 = vmatprep.subr.bf16.mxu0 0
        %505 = vmatpush1.bf16.msra.mxu0 %v485
        %506 = vmatprep.subr.bf16.mxu0 0
        %507 = vmatpush1.bf16.msra.mxu0 %v486
        %508 = vmatprep.subr.bf16.mxu0 0
        %509 = vmatpush1.bf16.msra.mxu0 %v487
        %510 = vmatprep.subr.bf16.mxu0 0
        %511 = vmatpush1.bf16.msra.mxu0 %v488
        %512 = vmatprep.subr.bf16.mxu0 0
        %513 = vmatpush1.bf16.msra.mxu0 %v489
        %514 = vmatprep.subr.bf16.mxu0 0
        %515 = vmatpush1.bf16.msra.mxu0 0
        %516 = vmatprep.subr.bf16.mxu0 0
        %517 = vmatpush1.bf16.msra.mxu0 0
        %518 = vmatprep.subr.bf16.mxu0 0
        %519 = vmatpush1.bf16.msra.mxu0 0
        %520 = vmatprep.subr.bf16.mxu0 0
        %521 = vmatpush1.bf16.msra.mxu0 0
        %522 = vmatprep.subr.bf16.mxu0 0
        %523 = vmatpush1.bf16.msra.mxu0 0
        %524 = vmatprep.subr.bf16.mxu0 0
        %525 = vmatpush1.bf16.msra.mxu0 0
        %526 = vmatprep.subr.bf16.mxu0 0
        %527 = vmatpush1.bf16.msra.mxu0 0
        %528 = vmatprep.subr.bf16.mxu0 0
        %529 = vmatpush1.bf16.msra.mxu0 0
        %530 = vmatprep.mubr.bf16.mxu0 0
        %531 = vmatmul.mubr.bf16.gmra.mrb[0].mxu0 %v351
        %v532 = vpop.f32.mrb[0].mxu0
        %v533 = vadd.f32 %v449, %v532
        %v534 = vpop.f32.mrb[0].mxu0
        %v535 = vpop.f32.mrb[0].mxu0
        %v536 = vpop.f32.mrb[0].mxu0
        %537 = vdwg.mxu0
        %v538 = vld [vmem:[%s4] sm:$0x1]
        %v540 = vlaneseq
        %v541 = vshrl.u32 %v540, 7
        %v542 = vsub.s32 0, %v541
        %v543 = vrot.slane %v538, %v542
        %v545 = vadd.f32 %v533, %v543
        %v546 = vtanh.pop %v545
        %v547 = vpack.c.bf16 %v546, %v546
        %v548 = vld [vmem:[%s5] sm:$0xff]
        %v549 = vld [vmem:[%s5 + $0x8] sm:$0xff]
        %v550 = vld [vmem:[%s5 + $0x10] sm:$0xff]
        %v551 = vld [vmem:[%s5 + $0x18] sm:$0xff]
        %v552 = vld [vmem:[%s5 + $0x20] sm:$0xff]
        %v553 = vld [vmem:[%s5 + $0x28] sm:$0xff]
        %v554 = vld [vmem:[%s5 + $0x30] sm:$0xff]
        %v555 = vld [vmem:[%s5 + $0x38] sm:$0xff]
        %v556 = vld [vmem:[%s5 + $0x40] sm:$0xff]
        %v557 = vld [vmem:[%s5 + $0x48] sm:$0xff]
        %v558 = vld [vmem:[%s5 + $0x50] sm:$0xff]
        %v559 = vld [vmem:[%s5 + $0x58] sm:$0xff]
        %v560 = vld [vmem:[%s5 + $0x60] sm:$0xff]
        %v561 = vld [vmem:[%s5 + $0x68] sm:$0xff]
        %v562 = vld [vmem:[%s5 + $0x70] sm:$0xff]
        %v563 = vld [vmem:[%s5 + $0x78] sm:$0xff]
        %v564 = vld [vmem:[%s6] sm:$0x3]
        %v566 = vlaneseq
        %v567 = vshrl.u32 %v566, 7
        %v568 = vsub.s32 0, %v567
        %v569 = vrot.slane %v564, %v568
        %v570 = vlaneseq
        %v571 = vshrl.u32 %v570, 7
        %v572 = vsub.s32 1, %v571
        %v573 = vrot.slane %v564, %v572
        %v592 = vunpack.c.l.b16 %v548
        %v593 = vunpack.c.h.b16 %v548
        %v594 = vunpack.c.l.b16 %v549
        %v595 = vunpack.c.h.b16 %v549
        %v596 = vunpack.c.l.b16 %v550
        %v597 = vunpack.c.h.b16 %v550
        %v598 = vunpack.c.l.b16 %v551
        %v599 = vunpack.c.h.b16 %v551
        %v600 = vunpack.c.l.b16 %v552
        %v601 = vunpack.c.h.b16 %v552
        %v602 = vunpack.c.l.b16 %v553
        %v603 = vunpack.c.h.b16 %v553
        %v604 = vunpack.c.l.b16 %v554
        %v605 = vunpack.c.h.b16 %v554
        %v606 = vunpack.c.l.b16 %v555
        %v607 = vunpack.c.h.b16 %v555
        %v608 = vunpack.c.l.b16 %v556
        %v609 = vunpack.c.h.b16 %v556
        %v610 = vunpack.c.l.b16 %v557
        %v611 = vunpack.c.h.b16 %v557
        %v612 = vunpack.c.l.b16 %v558
        %v613 = vunpack.c.h.b16 %v558
        %v614 = vunpack.c.l.b16 %v559
        %v615 = vunpack.c.h.b16 %v559
        %v616 = vunpack.c.l.b16 %v560
        %v617 = vunpack.c.h.b16 %v560
        %v618 = vunpack.c.l.b16 %v561
        %v619 = vunpack.c.h.b16 %v561
        %v620 = vunpack.c.l.b16 %v562
        %v621 = vunpack.c.h.b16 %v562
        %v622 = vunpack.c.l.b16 %v563
        %v623 = vunpack.c.h.b16 %v563
        %v624 = vpack.c.b16 %v594, %v592
        %v625 = vpack.c.b16 %v595, %v593
        %v626 = vpack.c.b16 %v598, %v596
        %v627 = vpack.c.b16 %v599, %v597
        %v628 = vpack.c.b16 %v602, %v600
        %v629 = vpack.c.b16 %v603, %v601
        %v630 = vpack.c.b16 %v606, %v604
        %v631 = vpack.c.b16 %v607, %v605
        %v632 = vpack.c.b16 %v610, %v608
        %v633 = vpack.c.b16 %v611, %v609
        %v634 = vpack.c.b16 %v614, %v612
        %v635 = vpack.c.b16 %v615, %v613
        %v636 = vpack.c.b16 %v618, %v616
        %v637 = vpack.c.b16 %v619, %v617
        %v638 = vpack.c.b16 %v622, %v620
        %v639 = vpack.c.b16 %v623, %v621
        %656 = vmatprep.subr.bf16.mxu0 %v625
        %657 = vmatpush1.bf16.msra.mxu0 %v624
        %658 = vmatprep.subr.bf16.mxu0 %v627
        %659 = vmatpush1.bf16.msra.mxu0 %v626
        %660 = vmatprep.subr.bf16.mxu0 %v629
        %661 = vmatpush1.bf16.msra.mxu0 %v628
        %662 = vmatprep.subr.bf16.mxu0 %v631
        %663 = vmatpush1.bf16.msra.mxu0 %v630
        %664 = vmatprep.subr.bf16.mxu0 %v633
        %665 = vmatpush1.bf16.msra.mxu0 %v632
        %666 = vmatprep.subr.bf16.mxu0 %v635
        %667 = vmatpush1.bf16.msra.mxu0 %v634
        %668 = vmatprep.subr.bf16.mxu0 %v637
        %669 = vmatpush1.bf16.msra.mxu0 %v636
        %670 = vmatprep.subr.bf16.mxu0 %v639
        %671 = vmatpush1.bf16.msra.mxu0 %v638
        %672 = vmatprep.subr.bf16.mxu0 0
        %673 = vmatpush1.bf16.msra.mxu0 0
        %674 = vmatprep.subr.bf16.mxu0 0
        %675 = vmatpush1.bf16.msra.mxu0 0
        %676 = vmatprep.subr.bf16.mxu0 0
        %677 = vmatpush1.bf16.msra.mxu0 0
        %678 = vmatprep.subr.bf16.mxu0 0
        %679 = vmatpush1.bf16.msra.mxu0 0
        %680 = vmatprep.subr.bf16.mxu0 0
        %681 = vmatpush1.bf16.msra.mxu0 0
        %682 = vmatprep.subr.bf16.mxu0 0
        %683 = vmatpush1.bf16.msra.mxu0 0
        %684 = vmatprep.subr.bf16.mxu0 0
        %685 = vmatpush1.bf16.msra.mxu0 0
        %686 = vmatprep.subr.bf16.mxu0 0
        %687 = vmatpush1.bf16.msra.mxu0 0
        %688 = vmatprep.mubr.bf16.mxu0 0
        %689 = vmatmul.mubr.bf16.gmra.mrb[0].mxu0 %v547
        %v690 = vpop.f32.mrb[0].mxu0
        %v691 = vadd.f32 %v569, %v690
        %v692 = vpop.f32.mrb[0].mxu0
        %v693 = vadd.f32 %v573, %v692
        %v694 = vpop.f32.mrb[0].mxu0
        %v695 = vpop.f32.mrb[0].mxu0
        %696 = vdwg.mxu0
        %v697 = vmax.f32 %v691, %v693
        %698 = vmax.xlane.f32.xlu0 %v697
        %v699 = vpop.xlane.xlu0 %698
        %v700 = vsub.f32 %v691, %v699
        %v701 = vsub.f32 %v693, %v699
        %v702 = vmul.f32 %v700, 1.442695
        %v703 = vpow.pop %v702
        %v704 = vmul.f32 %v701, 1.442695
        %v705 = vpow.pop %v704
        %v706 = vadd.f32 %v703, %v705
        %707 = vadd.xlane.f32.xlu0 %v706
        %v708 = vpop.xlane.xlu0 %707
        %v709 = vlog2.pop %v708
        %v710 = vmul.f32 %v709, 0.6931472
        %v711 = vsub.f32 %v700, %v710
        %v712 = vsub.f32 %v701, %v710
        %713 = vst [vmem:[%s333] sm:$0xff] %v711
        %714 = vst [vmem:[%s333 + $0x8] sm:$0xff] %v712
        %p715 = scmp.eq.s32.totalorder %s31, 0
        // Predicated region
        $region49: #{cvae_forward.7} parent=47 // pred_check
          %p716 = pneg %p715
        $region50: #{cvae_forward.7} parent=47 // pred_check_branch
          %718 = sbr.rel (%p716) target = $region52
        $region51: #{cvae_forward.7} parent=47 // pred_region
          %719 = vst [vmem:[%s339 - $0x7] sm:$0x80] %v546
        $region52: #{cvae_forward.7} parent=47 // pred_fallthru
          _
        %s720 = sand.u32 %s207, 1
        %s721 = scalar_lea.sflag [#allocation3], %s720
        %s722 = sand.u32 %s207, 1
        %s723 = smul.addr %s722, 16
        %s724 = scalar_lea.vmem [#allocation2], %s723
        %s725 = sand.u32 %s233, 1
        %s726 = scalar_lea.sflag [#allocation5], %s725
        %s727 = sand.u32 %s233, 1
        %s728 = scalar_lea.vmem [#allocation4], %s727
        // Predicated region
        $region53: #{cvae_forward.7} parent=47 // pred_check
          %p729 = pneg %p217
        $region54: #{cvae_forward.7} parent=47 // pred_check_branch
          %731 = sbr.rel (%p729) target = $region56
        $region55: #{cvae_forward.7} parent=47 // pred_region
          %s733 = ssub.s32 256, 256
          %734 = vsyncadd %s721, %s733
          %s735 = smul.addr %s31, 2
          %s736 = smul.addr %s30, 2
          %s737 = sadd.s32 %s735, %s736
          %s738 = smul.addr %s737, 128
          %s739 = scalar_lea.hbm %s7, %s738
          %s741 = sshll.u32 %s724, 4
          %s742 = int_to_ptr.vmem [resolvable:$true] %s741
          %744 = dma.vmem_to_hbm [thread:$0]  %s742, 256, %s739, %s721
        $region56: #{cvae_forward.7} parent=47 // pred_fallthru
          _
        // Predicated region
        $region57: #{cvae_forward.7} parent=47 // pred_check
          %p745 = pneg %p243
        $region58: #{cvae_forward.7} parent=47 // pred_check_branch
          %747 = sbr.rel (%p745) target = $region60
        $region59: #{cvae_forward.7} parent=47 // pred_region
          %s749 = ssub.s32 16, 16
          %750 = vsyncadd %s726, %s749
          %s751 = smul.addr %s30, 16
          %s752 = scalar_lea.hbm %s8, %s751
          %s754 = sshll.u32 %s728, 4
          %s755 = int_to_ptr.vmem [resolvable:$true] %s754
          %757 = dma.vmem_to_hbm [thread:$0]  %s755, 16, %s752, %s726
        $region60: #{cvae_forward.7} parent=47 // pred_fallthru
          _
      $region48: #{cvae_forward.7} parent=5 // pred_fallthru
        _
      %p758 = scmp.le.s32.totalorder 2, %s21
      // Predicated region
      $region61: #{cvae_forward.7} parent=5 // pred_check
        %p759 = pneg %p758
      $region62: #{cvae_forward.7} parent=5 // pred_check_branch
        %761 = sbr.rel (%p759) target = $region64
      $region63: #{cvae_forward.7} parent=5 // pred_region
        %s762 = ssub.s32 %s21, 2
        // Predicated region
        $region65: #{cvae_forward.7} parent=63 // pred_check
          %p763 = pneg %p223
        $region66: #{cvae_forward.7} parent=63 // pred_check_branch
          %765 = sbr.rel (%p763) target = $region68
        $region67: #{cvae_forward.7} parent=63 // pred_region
          %s766 = sand.u32 %s208, 1
          %s767 = scalar_lea.sflag [#allocation3], %s766
          %s768 = sand.u32 %s208, 1
          %s769 = smul.addr %s768, 16
          %s770 = scalar_lea.vmem [#allocation2], %s769
          %771 = dma.done %s767, 256
        $region68: #{cvae_forward.7} parent=63 // pred_fallthru
          _
        // Predicated region
        $region69: #{cvae_forward.7} parent=63 // pred_check
          %p772 = pneg %p249
        $region70: #{cvae_forward.7} parent=63 // pred_check_branch
          %774 = sbr.rel (%p772) target = $region72
        $region71: #{cvae_forward.7} parent=63 // pred_region
          %s775 = sand.u32 %s234, 1
          %s776 = scalar_lea.sflag [#allocation5], %s775
          %s777 = sand.u32 %s234, 1
          %s778 = scalar_lea.vmem [#allocation4], %s777
          %779 = dma.done %s776, 16
        $region72: #{cvae_forward.7} parent=63 // pred_fallthru
          _
      $region64: #{cvae_forward.7} parent=5 // pred_fallthru
        _
    $region6: #{cvae_forward.7} parent=1 // loop_footer
      %s25 = sadd.s32 1, %s21
    $region7: #{cvae_forward.7} parent=1 // loop_footer_branch
      %20 = sbr.rel target = $region3
    $region8: #{cvae_forward.7} parent=1 // loop_exit
      _
    %780 = vsyncpa [#allocation3], 1
    %s781 = scalar_lea.sflag [#allocation3], 1
    %782 = vsyncpa %s781, 1
    %783 = vsyncpa [#allocation5], 1
    %s784 = scalar_lea.sflag [#allocation5], 1
    %785 = vsyncpa %s784, 1

</llo_original>
